<compile_context>
chip_gen: v6e
topology: v6e:2x2x1
jax: 0.10.0
libtpu: 0.0.40
codegen_flags: <defaults>
</compile_context>

<pallas_src>
import functools

import jax
import jax.numpy as jnp
from jax.experimental import pallas as pl
from jax.experimental.pallas import tpu as pltpu

F32 = jnp.float32
BF16 = jnp.bfloat16
LANE = 128
TILE_M = 256


def _ru(x, m):
    return (x + m - 1) // m * m


def _tiles_for(M):
    tile_m = TILE_M if M >= TILE_M else _ru(M, 16)
    return tile_m, _ru(M, tile_m)


# --------------------------------- Pallas kernels ---------------------------------

def _gemm_bias_kernel(a_ref, b_ref, bias_ref, o_ref, *, relu):
    # relu?( A @ B + bias )  -- conv (BN folded) + activation
    acc = jnp.dot(a_ref[...], b_ref[...], preferred_element_type=jnp.float32)
    y = acc + bias_ref[...]
    if relu:
        y = jnp.maximum(y, 0.0)
    o_ref[...] = y.astype(o_ref.dtype)


def _gemm_bias_res_kernel(a_ref, b_ref, bias_ref, res_ref, o_ref, *, relu):
    # relu?( A @ B + bias + residual )  -- conv2 + BN2 + residual add + final ReLU, fused
    acc = jnp.dot(a_ref[...], b_ref[...], preferred_element_type=jnp.float32)
    y = acc + bias_ref[...] + res_ref[...].astype(jnp.float32)
    if relu:
        y = jnp.maximum(y, 0.0)
    o_ref[...] = y.astype(o_ref.dtype)


# --------------------------------- Pallas wrapper ----------------------------------

def fused_conv_gemm(A, Bp, biasp, residual_padded=None, relu=True, out_dtype=F32):
    """relu?(A @ Bp + bias (+ residual)).

    A: (M, K) activation im2col matrix (any float dtype; cast to bf16 here).
    Bp: (Kp, Np) bf16, pre-padded folded weights. biasp: (1, Np) f32.
    residual_padded: optional (Mp, Np) f32, already in the padded output layout.
    Returns the padded (Mp, Np) result in `out_dtype`; caller slices to (M, Cout).
    """
    M, K = A.shape
    Kp, Np = Bp.shape
    tile_m, Mp = _tiles_for(M)
    Ap = jnp.pad(A.astype(BF16), ((0, Mp - M), (0, Kp - K)))

    in_specs = [
        pl.BlockSpec((tile_m, Kp), lambda i: (i, 0)),
        pl.BlockSpec((Kp, Np), lambda i: (0, 0)),
        pl.BlockSpec((1, Np), lambda i: (0, 0)),
    ]
    args = [Ap, Bp, biasp]
    if residual_padded is not None:
        in_specs.append(pl.BlockSpec((tile_m, Np), lambda i: (i, 0)))
        args.append(residual_padded)
        kernel = functools.partial(_gemm_bias_res_kernel, relu=relu)
    else:
        kernel = functools.partial(_gemm_bias_kernel, relu=relu)

    res_bytes = (Mp * Np * residual_padded.dtype.itemsize
                 if residual_padded is not None else 0)
    cost = pl.CostEstimate(
        flops=2 * Mp * Kp * Np,
        transcendentals=0,
        bytes_accessed=(Mp * Kp + Kp * Np) * 2 + res_bytes
        + Mp * Np * jnp.dtype(out_dtype).itemsize,
    )
    return pl.pallas_call(
        kernel,
        out_shape=jax.ShapeDtypeStruct((Mp, Np), out_dtype),
        grid=(Mp // tile_m,),
        in_specs=in_specs,
        out_specs=pl.BlockSpec((tile_m, Np), lambda i: (i, 0)),
        compiler_params=pltpu.CompilerParams(
            dimension_semantics=("parallel",),
            vmem_limit_bytes=32 * 1024 * 1024,
        ),
        cost_estimate=cost,
    )(*args)


# ------------------------------- im2col (channels-last) ----------------------------

def _im2col_ndhwc(x, ksize, stride, pad):
    """x: (N, D, H, W, C). Returns A=(N*Do*Ho*Wo, ksize^3*C) bf16 + output dims.

    Channels-last layout keeps the final reshape contiguous (no transpose copy);
    column order is tap-major (i,j,k) then channel, matching the weight packing below.
    """
    N, D, H, W, C = x.shape
    Do = (D + 2 * pad - ksize) // stride + 1
    Ho = (H + 2 * pad - ksize) // stride + 1
    Wo = (W + 2 * pad - ksize) // stride + 1
    xb = x.astype(BF16)
    if pad:
        xb = jnp.pad(xb, ((0, 0), (pad, pad), (pad, pad), (pad, pad), (0, 0)))
    taps = []
    for i in range(ksize):
        for j in range(ksize):
            for k in range(ksize):
                taps.append(xb[:, i:i + Do * stride:stride,
                                  j:j + Ho * stride:stride,
                                  k:k + Wo * stride:stride, :])
    A = taps[0] if len(taps) == 1 else jnp.concatenate(taps, axis=-1)
    A = A.reshape(N * Do * Ho * Wo, ksize * ksize * ksize * C)
    return A, (N, Do, Ho, Wo)


# ------------------------------- parameter preparation ------------------------------

def _conv_w(key, shape):
    fan_in = shape[1] * shape[2] * shape[3] * shape[4]
    return jax.random.normal(key, shape, F32) * (2.0 / fan_in) ** 0.5


def _bn_params(key, c):
    k1, k2, k3, k4 = jax.random.split(key, 4)
    gamma = 1.0 + 0.1 * jax.random.normal(k1, (c,), F32)
    beta = 0.1 * jax.random.normal(k2, (c,), F32)
    mean = 0.05 * jax.random.normal(k3, (c,), F32)
    var = 1.0 + 0.1 * jnp.abs(jax.random.normal(k4, (c,), F32))
    return gamma, beta, mean, var


def _fold_bn(w, bn, eps=1e-5):
    gamma, beta, mean, var = bn
    scale = gamma / jnp.sqrt(var + eps)
    w_f = w * scale[:, None, None, None, None]
    b_f = beta - mean * scale
    return w_f, b_f


def _prep_gemm_operands(w, bn):
    """Fold eval-mode BN into the conv weight; pack to (Kp, Np) bf16 and (1, Np) f32."""
    w_f, b_f = _fold_bn(w, bn)
    Cout, Cin, kd, kh, kw = w_f.shape
    K = kd * kh * kw * Cin
    B = jnp.transpose(w_f, (2, 3, 4, 1, 0)).reshape(K, Cout)  # rows: tap-major, ch inner
    Kp, Np = _ru(K, LANE), _ru(Cout, LANE)
    Bp = jnp.pad(B, ((0, Kp - K), (0, Np - Cout))).astype(BF16)
    biasp = jnp.pad(b_f, (0, Np - Cout)).reshape(1, Np).astype(F32)
    return Bp, biasp, w_f, b_f


def prepare_block(key, in_planes, planes, stride, downsample):
    """BasicBlock1 parameters with BN pre-folded and weights pre-padded/packed."""
    ks = jax.random.split(key, 6)
    B1, bias1, w1f, b1f = _prep_gemm_operands(
        _conv_w(ks[0], (planes, in_planes, 3, 3, 3)), _bn_params(ks[1], planes))
    B2, bias2, w2f, b2f = _prep_gemm_operands(
        _conv_w(ks[2], (planes, planes, 3, 3, 3)), _bn_params(ks[3], planes))
    blk = dict(stride=stride, in_planes=in_planes, planes=planes,
               B1=B1, bias1=bias1, B2=B2, bias2=bias2, ds=None,
               w1f=w1f, b1f=b1f, w2f=w2f, b2f=b2f, ds_ref=None)
    if downsample:  # shortcut type 'B': conv1x1x1(stride) + BN
        Bd, biasd, wdf, bdf = _prep_gemm_operands(
            _conv_w(ks[4], (planes, in_planes, 1, 1, 1)), _bn_params(ks[5], planes))
        blk["ds"] = (Bd, biasd)
        blk["ds_ref"] = (wdf, bdf)
    return blk


# ----------------------------------- forward pass -----------------------------------

def basic_block_forward(x_ncdhw, blk):
    """BasicBlock1.forward: conv3x3x3(s)->BN->ReLU->conv3x3x3->BN->(+residual)->ReLU."""
    s = blk["stride"]
    planes = blk["planes"]
    x = jnp.transpose(x_ncdhw, (0, 2, 3, 4, 1))            # -> NDHWC

    # conv1 + bn1 + relu (single fused GEMM); output stored bf16 (consumed as bf16).
    A1, (N, Do, Ho, Wo) = _im2col_ndhwc(x, 3, s, 1)
    M = N * Do * Ho * Wo
    out1_p = fused_conv_gemm(A1, blk["B1"], blk["bias1"], relu=True, out_dtype=BF16)
    out1 = out1_p[:M, :planes].reshape(N, Do, Ho, Wo, planes)

    # residual branch, kept in the padded (Mp, Np) layout so it plugs straight into
    # conv2's fused epilogue
    tile_m, Mp = _tiles_for(M)
    Np = blk["B2"].shape[1]
    if blk["ds"] is not None:
        Bd, biasd = blk["ds"]
        Ad, _ = _im2col_ndhwc(x, 1, s, 0)
        res_p = fused_conv_gemm(Ad, Bd, biasd, relu=False, out_dtype=F32)  # (Mp, Np)
    else:
        # identity shortcut (stride==1, in_planes==planes): rows already line up
        res_rows = x.reshape(M, blk["in_planes"]).astype(F32)
        res_p = jnp.pad(res_rows, ((0, Mp - M), (0, Np - blk["in_planes"])))

    # conv2 + bn2 + residual add + final relu, all fused in one GEMM epilogue
    A2, _ = _im2col_ndhwc(out1, 3, 1, 1)
    out_p = fused_conv_gemm(A2, blk["B2"], blk["bias2"],
                            residual_padded=res_p, relu=True, out_dtype=F32)
    out = out_p[:M, :planes].reshape(N, Do, Ho, Wo, planes)
    return jnp.transpose(out, (0, 4, 1, 2, 3))             # back to NCDHW


# -------------------------- pure-JAX reference (sanity check) -----------------------

def _ref_conv_bn(x_ndhwc, w_f, b_f, stride, pad):
    # Mirror the kernel's numerics: bf16 operands, f32 accumulation.
    xq = x_ndhwc.astype(BF16).astype(F32)
    wq = w_f.astype(BF16).astype(F32)
    wt = jnp.transpose(wq, (2, 3, 4, 1, 0))                 # (kd,kh,kw,Cin,Cout)=DHWIO
    y = jax.lax.conv_general_dilated(
        xq, wt, window_strides=(stride,) * 3, padding=[(pad, pad)] * 3,
        dimension_numbers=("NDHWC", "DHWIO", "NDHWC"),
        precision=jax.lax.Precision.HIGHEST)
    return y + b_f


def ref_block_forward(x_ncdhw, blk):
    s = blk["stride"]
    x = jnp.transpose(x_ncdhw, (0, 2, 3, 4, 1))
    out1 = jnp.maximum(_ref_conv_bn(x, blk["w1f"], blk["b1f"], s, 1), 0.0)
    out1 = out1.astype(BF16).astype(F32)                    # kernel stores conv1 as bf16
    if blk["ds_ref"] is not None:
        wdf, bdf = blk["ds_ref"]
        res = _ref_conv_bn(x, wdf, bdf, s, 0)
    else:
        res = x.astype(F32)
    out = jnp.maximum(_ref_conv_bn(out1, blk["w2f"], blk["b2f"], 1, 1) + res, 0.0)
    return jnp.transpose(out, (0, 4, 1, 2, 3))


# --------------------------------------- main ----------------------------------------

if __name__ == "__main__":
    key = jax.random.PRNGKey(0)
    kp1, kp2, kx = jax.random.split(key, 3)

    # Block with downsample (stride=2, 4 -> 8 channels): exercises conv1x1x1+BN shortcut.
    blk1 = prepare_block(kp1, in_planes=4, planes=8, stride=2, downsample=True)
    # Identity-shortcut block (stride=1, 8 -> 8): residual fused directly in the epilogue.
    blk2 = prepare_block(kp2, in_planes=8, planes=8, stride=1, downsample=False)

    x = jax.random.normal(kx, (2, 4, 8, 16, 16), F32)       # NCDHW

    @jax.jit
    def forward(inp):
        y = basic_block_forward(inp, blk1)
        y = basic_block_forward(y, blk2)
        return y

    @jax.jit
    def forward_ref(inp):
        y = ref_block_forward(inp, blk1)
        y = ref_block_forward(y, blk2)
        return y

    out = forward(x)
    jax.block_until_ready(out)
    assert out.shape == (2, 8, 4, 8, 8), out.shape
    assert bool(jnp.all(jnp.isfinite(out)))

    ref = forward_ref(x)
    jax.block_until_ready(ref)
    max_err = float(jnp.max(jnp.abs(out - ref)))
    assert max_err < 1e-2, f"mismatch vs reference: max abs err {max_err}"

    print("KERNEL_OK")
</pallas_src>

<mosaic_0001>
module attributes {stable_mosaic.version = 11 : i64} {
  func.func @_gemm_bias_kernel(%arg0: i32, %arg1: memref<256x128xbf16, #tpu.memory_space<vmem>>, %arg2: memref<128x128xbf16, #tpu.memory_space<vmem>>, %arg3: memref<1x128xf32, #tpu.memory_space<vmem>>, %arg4: memref<256x128xf32, #tpu.memory_space<vmem>>) attributes {dimension_semantics = [#tpu.dimension_semantics<parallel>], iteration_bounds = array<i64: 2>, scalar_prefetch = 0 : i64, scratch_operands = 0 : i64, tpu.core_type = #tpu.core_type<tc>, window_params = [{transform_indices = @transform_0, window_bounds = array<i64: 256, 128>}, {pipeline_mode = #tpu.pipeline_mode<synchronous>, transform_indices = @transform_1, window_bounds = array<i64: 128, 128>}, {pipeline_mode = #tpu.pipeline_mode<synchronous>, transform_indices = @transform_2, window_bounds = array<i64: 1, 128>}, {transform_indices = @transform_3, window_bounds = array<i64: 256, 128>}]} {
    %c0 = arith.constant 0 : index
    %c0_0 = arith.constant 0 : index
    %0 = vector.load %arg1[%c0, %c0_0] : memref<256x128xbf16, #tpu.memory_space<vmem>>, vector<256x128xbf16>
    %c0_1 = arith.constant 0 : index
    %c0_2 = arith.constant 0 : index
    %1 = vector.load %arg2[%c0_1, %c0_2] : memref<128x128xbf16, #tpu.memory_space<vmem>>, vector<128x128xbf16>
    %cst = arith.constant dense<0.000000e+00> : vector<256x128xf32>
    %2 = tpu.matmul %0, %1, %cst {dimension_numbers = #tpu.dot_dimension_numbers<[1], [0], [0], [1], [0, 0, 1, 1], [], []>} : vector<256x128xbf16>, vector<128x128xbf16>, vector<256x128xf32> -> vector<256x128xf32>
    %c0_3 = arith.constant 0 : index
    %c0_4 = arith.constant 0 : index
    %3 = vector.load %arg3[%c0_3, %c0_4] : memref<1x128xf32, #tpu.memory_space<vmem>>, vector<1x128xf32>
    %4 = vector.broadcast %3 : vector<1x128xf32> to vector<256x128xf32>
    %5 = arith.addf %2, %4 : vector<256x128xf32>
    %c0_5 = arith.constant 0 : index
    %c0_6 = arith.constant 0 : index
    %6 = vector.load %arg4[%c0_5, %c0_6] : memref<256x128xf32, #tpu.memory_space<vmem>>, vector<256x128xf32>
    tpu.vector_store %arg4[%c0_5, %c0_6], %5 {strides = array<i32>} : memref<256x128xf32, #tpu.memory_space<vmem>>, vector<256x128xf32>,
    return
  }
  func.func @transform_0(%arg0: i32) -> (i32, i32) {
    %c0_i32 = arith.constant 0 : i32
    %c0_i32_0 = arith.constant 0 : i32
    return %arg0, %c0_i32 : i32, i32
  }
  func.func @transform_1(%arg0: i32) -> (i32, i32) {
    %c0_i32 = arith.constant 0 : i32
    %c0_i32_0 = arith.constant 0 : i32
    %c0_i32_1 = arith.constant 0 : i32
    return %c0_i32, %c0_i32_0 : i32, i32
  }
  func.func @transform_2(%arg0: i32) -> (i32, i32) {
    %c0_i32 = arith.constant 0 : i32
    %c0_i32_0 = arith.constant 0 : i32
    %c0_i32_1 = arith.constant 0 : i32
    return %c0_i32, %c0_i32_0 : i32, i32
  }
  func.func @transform_3(%arg0: i32) -> (i32, i32) {
    %c0_i32 = arith.constant 0 : i32
    %c0_i32_0 = arith.constant 0 : i32
    return %arg0, %c0_i32 : i32, i32
  }
}

module attributes {stable_mosaic.version = 11 : i64} {
  func.func @_gemm_bias_kernel(%arg0: i32, %arg1: memref<256x128xbf16, #tpu.memory_space<vmem>>, %arg2: memref<128x128xbf16, #tpu.memory_space<vmem>>, %arg3: memref<1x128xf32, #tpu.memory_space<vmem>>, %arg4: memref<256x128xbf16, #tpu.memory_space<vmem>>) attributes {dimension_semantics = [#tpu.dimension_semantics<parallel>], iteration_bounds = array<i64: 2>, scalar_prefetch = 0 : i64, scratch_operands = 0 : i64, tpu.core_type = #tpu.core_type<tc>, window_params = [{transform_indices = @transform_0, window_bounds = array<i64: 256, 128>}, {pipeline_mode = #tpu.pipeline_mode<synchronous>, transform_indices = @transform_1, window_bounds = array<i64: 128, 128>}, {pipeline_mode = #tpu.pipeline_mode<synchronous>, transform_indices = @transform_2, window_bounds = array<i64: 1, 128>}, {transform_indices = @transform_3, window_bounds = array<i64: 256, 128>}]} {
    %c0 = arith.constant 0 : index
    %c0_0 = arith.constant 0 : index
    %0 = vector.load %arg1[%c0, %c0_0] : memref<256x128xbf16, #tpu.memory_space<vmem>>, vector<256x128xbf16>
    %c0_1 = arith.constant 0 : index
    %c0_2 = arith.constant 0 : index
    %1 = vector.load %arg2[%c0_1, %c0_2] : memref<128x128xbf16, #tpu.memory_space<vmem>>, vector<128x128xbf16>
    %cst = arith.constant dense<0.000000e+00> : vector<256x128xf32>
    %2 = tpu.matmul %0, %1, %cst {dimension_numbers = #tpu.dot_dimension_numbers<[1], [0], [0], [1], [0, 0, 1, 1], [], []>} : vector<256x128xbf16>, vector<128x128xbf16>, vector<256x128xf32> -> vector<256x128xf32>
    %c0_3 = arith.constant 0 : index
    %c0_4 = arith.constant 0 : index
    %3 = vector.load %arg3[%c0_3, %c0_4] : memref<1x128xf32, #tpu.memory_space<vmem>>, vector<1x128xf32>
    %4 = vector.broadcast %3 : vector<1x128xf32> to vector<256x128xf32>
    %5 = arith.addf %2, %4 : vector<256x128xf32>
    %cst_5 = arith.constant 0.000000e+00 : f32
    %6 = vector.broadcast %cst_5 : f32 to vector<256x128xf32>
    %7 = arith.maximumf %5, %6 : vector<256x128xf32>
    %8 = arith.truncf %7 : vector<256x128xf32> to vector<256x128xbf16>
    %c0_6 = arith.constant 0 : index
    %c0_7 = arith.constant 0 : index
    %9 = vector.load %arg4[%c0_6, %c0_7] : memref<256x128xbf16, #tpu.memory_space<vmem>>, vector<256x128xbf16>
    tpu.vector_store %arg4[%c0_6, %c0_7], %8 {strides = array<i32>} : memref<256x128xbf16, #tpu.memory_space<vmem>>, vector<256x128xbf16>,
    return
  }
  func.func @transform_0(%arg0: i32) -> (i32, i32) {
    %c0_i32 = arith.constant 0 : i32
    %c0_i32_0 = arith.constant 0 : i32
    return %arg0, %c0_i32 : i32, i32
  }
  func.func @transform_1(%arg0: i32) -> (i32, i32) {
    %c0_i32 = arith.constant 0 : i32
    %c0_i32_0 = arith.constant 0 : i32
    %c0_i32_1 = arith.constant 0 : i32
    return %c0_i32, %c0_i32_0 : i32, i32
  }
  func.func @transform_2(%arg0: i32) -> (i32, i32) {
    %c0_i32 = arith.constant 0 : i32
    %c0_i32_0 = arith.constant 0 : i32
    %c0_i32_1 = arith.constant 0 : i32
    return %c0_i32, %c0_i32_0 : i32, i32
  }
  func.func @transform_3(%arg0: i32) -> (i32, i32) {
    %c0_i32 = arith.constant 0 : i32
    %c0_i32_0 = arith.constant 0 : i32
    return %arg0, %c0_i32 : i32, i32
  }
}

module attributes {stable_mosaic.version = 11 : i64} {
  func.func @_gemm_bias_res_kernel(%arg0: i32, %arg1: memref<256x256xbf16, #tpu.memory_space<vmem>>, %arg2: memref<256x128xbf16, #tpu.memory_space<vmem>>, %arg3: memref<1x128xf32, #tpu.memory_space<vmem>>, %arg4: memref<256x128xf32, #tpu.memory_space<vmem>>, %arg5: memref<256x128xf32, #tpu.memory_space<vmem>>) attributes {dimension_semantics = [#tpu.dimension_semantics<parallel>], iteration_bounds = array<i64: 2>, scalar_prefetch = 0 : i64, scratch_operands = 0 : i64, tpu.core_type = #tpu.core_type<tc>, window_params = [{transform_indices = @transform_0, window_bounds = array<i64: 256, 256>}, {pipeline_mode = #tpu.pipeline_mode<synchronous>, transform_indices = @transform_1, window_bounds = array<i64: 256, 128>}, {pipeline_mode = #tpu.pipeline_mode<synchronous>, transform_indices = @transform_2, window_bounds = array<i64: 1, 128>}, {transform_indices = @transform_3, window_bounds = array<i64: 256, 128>}, {transform_indices = @transform_4, window_bounds = array<i64: 256, 128>}]} {
    %c0 = arith.constant 0 : index
    %c0_0 = arith.constant 0 : index
    %0 = vector.load %arg1[%c0, %c0_0] : memref<256x256xbf16, #tpu.memory_space<vmem>>, vector<256x256xbf16>
    %c0_1 = arith.constant 0 : index
    %c0_2 = arith.constant 0 : index
    %1 = vector.load %arg2[%c0_1, %c0_2] : memref<256x128xbf16, #tpu.memory_space<vmem>>, vector<256x128xbf16>
    %cst = arith.constant dense<0.000000e+00> : vector<256x128xf32>
    %2 = tpu.matmul %0, %1, %cst {dimension_numbers = #tpu.dot_dimension_numbers<[1], [0], [0], [1], [0, 0, 1, 1], [], []>} : vector<256x256xbf16>, vector<256x128xbf16>, vector<256x128xf32> -> vector<256x128xf32>
    %c0_3 = arith.constant 0 : index
    %c0_4 = arith.constant 0 : index
    %3 = vector.load %arg3[%c0_3, %c0_4] : memref<1x128xf32, #tpu.memory_space<vmem>>, vector<1x128xf32>
    %4 = vector.broadcast %3 : vector<1x128xf32> to vector<256x128xf32>
    %5 = arith.addf %2, %4 : vector<256x128xf32>
    %c0_5 = arith.constant 0 : index
    %c0_6 = arith.constant 0 : index
    %6 = vector.load %arg4[%c0_5, %c0_6] : memref<256x128xf32, #tpu.memory_space<vmem>>, vector<256x128xf32>
    %7 = arith.addf %5, %6 : vector<256x128xf32>
    %cst_7 = arith.constant 0.000000e+00 : f32
    %8 = vector.broadcast %cst_7 : f32 to vector<256x128xf32>
    %9 = arith.maximumf %7, %8 : vector<256x128xf32>
    %c0_8 = arith.constant 0 : index
    %c0_9 = arith.constant 0 : index
    %10 = vector.load %arg5[%c0_8, %c0_9] : memref<256x128xf32, #tpu.memory_space<vmem>>, vector<256x128xf32>
    tpu.vector_store %arg5[%c0_8, %c0_9], %9 {strides = array<i32>} : memref<256x128xf32, #tpu.memory_space<vmem>>, vector<256x128xf32>,
    return
  }
  func.func @transform_0(%arg0: i32) -> (i32, i32) {
    %c0_i32 = arith.constant 0 : i32
    %c0_i32_0 = arith.constant 0 : i32
    return %arg0, %c0_i32 : i32, i32
  }
  func.func @transform_1(%arg0: i32) -> (i32, i32) {
    %c0_i32 = arith.constant 0 : i32
    %c0_i32_0 = arith.constant 0 : i32
    %c0_i32_1 = arith.constant 0 : i32
    return %c0_i32, %c0_i32_0 : i32, i32
  }
  func.func @transform_2(%arg0: i32) -> (i32, i32) {
    %c0_i32 = arith.constant 0 : i32
    %c0_i32_0 = arith.constant 0 : i32
    %c0_i32_1 = arith.constant 0 : i32
    return %c0_i32, %c0_i32_0 : i32, i32
  }
  func.func @transform_3(%arg0: i32) -> (i32, i32) {
    %c0_i32 = arith.constant 0 : i32
    %c0_i32_0 = arith.constant 0 : i32
    return %arg0, %c0_i32 : i32, i32
  }
  func.func @transform_4(%arg0: i32) -> (i32, i32) {
    %c0_i32 = arith.constant 0 : i32
    %c0_i32_0 = arith.constant 0 : i32
    return %arg0, %c0_i32 : i32, i32
  }
}

module attributes {stable_mosaic.version = 11 : i64} {
  func.func @_gemm_bias_kernel(%arg0: i32, %arg1: memref<256x256xbf16, #tpu.memory_space<vmem>>, %arg2: memref<256x128xbf16, #tpu.memory_space<vmem>>, %arg3: memref<1x128xf32, #tpu.memory_space<vmem>>, %arg4: memref<256x128xbf16, #tpu.memory_space<vmem>>) attributes {dimension_semantics = [#tpu.dimension_semantics<parallel>], iteration_bounds = array<i64: 2>, scalar_prefetch = 0 : i64, scratch_operands = 0 : i64, tpu.core_type = #tpu.core_type<tc>, window_params = [{transform_indices = @transform_0, window_bounds = array<i64: 256, 256>}, {pipeline_mode = #tpu.pipeline_mode<synchronous>, transform_indices = @transform_1, window_bounds = array<i64: 256, 128>}, {pipeline_mode = #tpu.pipeline_mode<synchronous>, transform_indices = @transform_2, window_bounds = array<i64: 1, 128>}, {transform_indices = @transform_3, window_bounds = array<i64: 256, 128>}]} {
    %c0 = arith.constant 0 : index
    %c0_0 = arith.constant 0 : index
    %0 = vector.load %arg1[%c0, %c0_0] : memref<256x256xbf16, #tpu.memory_space<vmem>>, vector<256x256xbf16>
    %c0_1 = arith.constant 0 : index
    %c0_2 = arith.constant 0 : index
    %1 = vector.load %arg2[%c0_1, %c0_2] : memref<256x128xbf16, #tpu.memory_space<vmem>>, vector<256x128xbf16>
    %cst = arith.constant dense<0.000000e+00> : vector<256x128xf32>
    %2 = tpu.matmul %0, %1, %cst {dimension_numbers = #tpu.dot_dimension_numbers<[1], [0], [0], [1], [0, 0, 1, 1], [], []>} : vector<256x256xbf16>, vector<256x128xbf16>, vector<256x128xf32> -> vector<256x128xf32>
    %c0_3 = arith.constant 0 : index
    %c0_4 = arith.constant 0 : index
    %3 = vector.load %arg3[%c0_3, %c0_4] : memref<1x128xf32, #tpu.memory_space<vmem>>, vector<1x128xf32>
    %4 = vector.broadcast %3 : vector<1x128xf32> to vector<256x128xf32>
    %5 = arith.addf %2, %4 : vector<256x128xf32>
    %cst_5 = arith.constant 0.000000e+00 : f32
    %6 = vector.broadcast %cst_5 : f32 to vector<256x128xf32>
    %7 = arith.maximumf %5, %6 : vector<256x128xf32>
    %8 = arith.truncf %7 : vector<256x128xf32> to vector<256x128xbf16>
    %c0_6 = arith.constant 0 : index
    %c0_7 = arith.constant 0 : index
    %9 = vector.load %arg4[%c0_6, %c0_7] : memref<256x128xbf16, #tpu.memory_space<vmem>>, vector<256x128xbf16>
    tpu.vector_store %arg4[%c0_6, %c0_7], %8 {strides = array<i32>} : memref<256x128xbf16, #tpu.memory_space<vmem>>, vector<256x128xbf16>,
    return
  }
  func.func @transform_0(%arg0: i32) -> (i32, i32) {
    %c0_i32 = arith.constant 0 : i32
    %c0_i32_0 = arith.constant 0 : i32
    return %arg0, %c0_i32 : i32, i32
  }
  func.func @transform_1(%arg0: i32) -> (i32, i32) {
    %c0_i32 = arith.constant 0 : i32
    %c0_i32_0 = arith.constant 0 : i32
    %c0_i32_1 = arith.constant 0 : i32
    return %c0_i32, %c0_i32_0 : i32, i32
  }
  func.func @transform_2(%arg0: i32) -> (i32, i32) {
    %c0_i32 = arith.constant 0 : i32
    %c0_i32_0 = arith.constant 0 : i32
    %c0_i32_1 = arith.constant 0 : i32
    return %c0_i32, %c0_i32_0 : i32, i32
  }
  func.func @transform_3(%arg0: i32) -> (i32, i32) {
    %c0_i32 = arith.constant 0 : i32
    %c0_i32_0 = arith.constant 0 : i32
    return %arg0, %c0_i32 : i32, i32
  }
}

</mosaic_0001>

<llo_original>
// kernel: forward.6
$region0: #{forward.6}
  #allocation0 [shape = 'u32[]', space=smem, size = 0x4, offset = 0x4, fixed_abs, tag = 'smem constant byte address 0x4 - core index']
  #allocation1 [shape = 'u32[144,128]{1,0:T(1,128)}', space=vmem, size = 0x12000, scoped, tag = 'internal scratch']
  %s0 = inlined_call_operand.vmem [shape: bf16[512,128], index: 0, kind: input, shape index: {}]
  %s1 = inlined_call_operand.vmem [shape: bf16[128,128], index: 1, kind: input, shape index: {}]
  %s2 = inlined_call_operand.vmem [shape: f32[1,128], index: 2, kind: input, shape index: {}]
  %s3 = inlined_call_operand.vmem [shape: f32[512,128], index: 3, kind: output, shape index: {}]
  %s4 = sld [smem:[#allocation0]]
  $region45: #{forward.6} parent=0
    _
  %s6 = ssub.s32 1, %s4
  %s7 = scalar_select 0, %s6, %s4
  loop: start=0, step=1, limit=4
  $region2: #{forward.6} parent=0 // loop_pre_header
    _
  $region3: #{forward.6} parent=0 // loop_header
    %s9 = sphi 0, %s13
    %p10 = scmp.ge.s32.totalorder %s9, 4
    %s19 = sphi 0, %s21
    %s22 = sphi 0, %s19
    %s23 = sphi 0, %s22
    %s39 = sphi 0, %s23
    %s43 = sphi 0, %s43
    %s45 = sphi 0, %s43
    %s46 = sphi 0, %s45
    %s60 = sphi 0, %s46
    %s64 = sphi 0, %s64
    %s66 = sphi 0, %s64
    %s67 = sphi 0, %s66
    %s81 = sphi 0, %s67
    %s87 = sphi 0, %s89
    %s90 = sphi 0, %s87
    %s91 = sphi 0, %s90
    %s107 = sphi 0, %s91
  $region4: #{forward.6} parent=0 // loop_header_branch
    %12 = sbr.rel (%p10) target = $region8
  $region5: #{forward.6} parent=0 // loop_body
    %s14 = ssub.s32 %s9, 1
    %s15 = ssub.s32 %s9, 2
    %s16 = sadd.s32 %s9, 1
    %s17 = ssub.s32 %s9, %s16
    %p18 = scmp.eq.s32.totalorder %s17, 0
    %s20 = sadd.s32 %s19, 1
    %s21 = scalar_select %p18, %s19, %s20
    %p24 = pneg %p18
    %p25 = scmp.eq.s32.totalorder %s9, 1
    %p26 = por %p24, %p25
    %p27 = scmp.ne.s32.totalorder %s19, %s22
    %p28 = scmp.eq.s32.totalorder %s9, 0
    %p29 = por %p27, %p28
    %p30 = scmp.ne.s32.totalorder %s19, %s22
    %p31 = scmp.eq.s32.totalorder %s14, 1
    %p32 = por %p30, %p31
    %p33 = scmp.ne.s32.totalorder %s22, %s23
    %p34 = scmp.eq.s32.totalorder %s14, 0
    %p35 = por %p33, %p34
    %p36 = scmp.ne.s32.totalorder %s22, %s23
    %p37 = scmp.eq.s32.totalorder %s15, 1
    %p38 = por %p36, %p37
    %p40 = scmp.ne.s32.totalorder %s23, %s39
    %p41 = scmp.eq.s32.totalorder %s15, 0
    %p42 = por %p40, %p41
    %s44 = sadd.s32 %s43, 1
    %p47 = scmp.eq.s32.totalorder %s9, 1
    %p48 = scmp.ne.s32.totalorder %s43, %s45
    %p49 = scmp.eq.s32.totalorder %s9, 0
    %p50 = por %p48, %p49
    %p51 = scmp.ne.s32.totalorder %s43, %s45
    %p52 = scmp.eq.s32.totalorder %s14, 1
    %p53 = por %p51, %p52
    %p54 = scmp.ne.s32.totalorder %s45, %s46
    %p55 = scmp.eq.s32.totalorder %s14, 0
    %p56 = por %p54, %p55
    %p57 = scmp.ne.s32.totalorder %s45, %s46
    %p58 = scmp.eq.s32.totalorder %s15, 1
    %p59 = por %p57, %p58
    %p61 = scmp.ne.s32.totalorder %s46, %s60
    %p62 = scmp.eq.s32.totalorder %s15, 0
    %p63 = por %p61, %p62
    %s65 = sadd.s32 %s64, 1
    %p68 = scmp.eq.s32.totalorder %s9, 1
    %p69 = scmp.ne.s32.totalorder %s64, %s66
    %p70 = scmp.eq.s32.totalorder %s9, 0
    %p71 = por %p69, %p70
    %p72 = scmp.ne.s32.totalorder %s64, %s66
    %p73 = scmp.eq.s32.totalorder %s14, 1
    %p74 = por %p72, %p73
    %p75 = scmp.ne.s32.totalorder %s66, %s67
    %p76 = scmp.eq.s32.totalorder %s14, 0
    %p77 = por %p75, %p76
    %p78 = scmp.ne.s32.totalorder %s66, %s67
    %p79 = scmp.eq.s32.totalorder %s15, 1
    %p80 = por %p78, %p79
    %p82 = scmp.ne.s32.totalorder %s67, %s81
    %p83 = scmp.eq.s32.totalorder %s15, 0
    %p84 = por %p82, %p83
    %s85 = ssub.s32 %s9, %s16
    %p86 = scmp.eq.s32.totalorder %s85, 0
    %s88 = sadd.s32 %s87, 1
    %s89 = scalar_select %p86, %s87, %s88
    %p92 = pneg %p86
    %p93 = scmp.eq.s32.totalorder %s9, 1
    %p94 = por %p92, %p93
    %p95 = scmp.ne.s32.totalorder %s87, %s90
    %p96 = scmp.eq.s32.totalorder %s9, 0
    %p97 = por %p95, %p96
    %p98 = scmp.ne.s32.totalorder %s87, %s90
    %p99 = scmp.eq.s32.totalorder %s14, 1
    %p100 = por %p98, %p99
    %p101 = scmp.ne.s32.totalorder %s90, %s91
    %p102 = scmp.eq.s32.totalorder %s14, 0
    %p103 = por %p101, %p102
    %p104 = scmp.ne.s32.totalorder %s90, %s91
    %p105 = scmp.eq.s32.totalorder %s15, 1
    %p106 = por %p104, %p105
    %p108 = scmp.ne.s32.totalorder %s91, %s107
    %p109 = scmp.eq.s32.totalorder %s15, 0
    %p110 = por %p108, %p109
    %p111 = scmp.le.s32.totalorder 1, %s9
    %p112 = scmp.lt.s32.totalorder %s9, 3
    %p113 = pnand %p111, %p112
    %p114 = pneg %p113
    // Predicated region
    $region9: #{forward.6} parent=5 // pred_check
      _
    $region10: #{forward.6} parent=5 // pred_check_branch
      %116 = sbr.rel (%p113) target = $region12
    $region11: #{forward.6} parent=5 // pred_region
      %s117 = ssub.s32 %s9, 1
      // Predicated region
      $region13: #{forward.6} parent=11 // pred_check
        %p118 = pneg %p56
      $region14: #{forward.6} parent=11 // pred_check_branch
        %120 = sbr.rel (%p118) target = $region16
      $region15: #{forward.6} parent=11 // pred_region
        _
      $region16: #{forward.6} parent=11 // pred_fallthru
        _
      // Predicated region
      $region17: #{forward.6} parent=11 // pred_check
        %p121 = pneg %p77
      $region18: #{forward.6} parent=11 // pred_check_branch
        %123 = sbr.rel (%p121) target = $region20
      $region19: #{forward.6} parent=11 // pred_region
        _
      $region20: #{forward.6} parent=11 // pred_fallthru
        _
    $region12: #{forward.6} parent=5 // pred_fallthru
      _
    %p124 = scmp.lt.s32.totalorder %s9, 2
    // Predicated region
    $region21: #{forward.6} parent=5 // pred_check
      %p125 = pneg %p124
    $region22: #{forward.6} parent=5 // pred_check_branch
      %127 = sbr.rel (%p125) target = $region24
    $region23: #{forward.6} parent=5 // pred_region
      // Predicated region
      $region25: #{forward.6} parent=23 // pred_check
        %p128 = pneg %p29
      $region26: #{forward.6} parent=23 // pred_check_branch
        %130 = sbr.rel (%p128) target = $region28
      $region27: #{forward.6} parent=23 // pred_region
        %s131 = smul.u32 32, %s9
        %p132 = scmp.lt.s32.totalorder %s131, 63
        %s133 = scalar_select %p132, %s131, 63
        %s134 = smul.addr %s133, 4
        %s135 = scalar_lea.vmem %s0, %s134
        %s136 = smul.u32 32, %s9
      $region28: #{forward.6} parent=23 // pred_fallthru
        _
    $region24: #{forward.6} parent=5 // pred_fallthru
      _
    %p137 = scmp.le.s32.totalorder 1, %s9
    %p138 = scmp.lt.s32.totalorder %s9, 3
    %p139 = pnand %p137, %p138
    %p140 = pneg %p139
    // Predicated region
    $region29: #{forward.6} parent=5 // pred_check
      _
    $region30: #{forward.6} parent=5 // pred_check_branch
      %142 = sbr.rel (%p139) target = $region32
    $region31: #{forward.6} parent=5 // pred_region
      %s143 = ssub.s32 %s9, 1
      %s144 = smul.u32 32, %s14
      %p145 = scmp.lt.s32.totalorder %s144, 63
      %s146 = scalar_select %p145, %s144, 63
      %s147 = smul.addr %s146, 4
      %s148 = scalar_lea.vmem %s0, %s147
      %p149 = pneg %p35
      %p150 = pneg %p32
      %p151 = pneg %p56
      %p152 = pneg %p53
      %p153 = pneg %p77
      %p154 = pneg %p74
      %p155 = pneg %p103
      %p156 = pneg %p100
      %s157 = smul.u32 32, %s14
      %p158 = scmp.lt.s32.totalorder %s157, 63
      %s159 = scalar_select %p158, %s157, 63
      %s160 = smul.addr %s159, 8
      %s161 = scalar_lea.vmem %s3, %s160
      %s162 = smul.u32 32, %s14
      %p163 = scmp.lt.s32.totalorder %s162, 63
      %s164 = scalar_select %p163, %s162, 63
      %s165 = smul.addr %s164, 4
      %s166 = scalar_lea.vmem %s0, %s165
      %s167 = smul.u32 32, %s14
      %s168 = smul.u32 32, %s14
      %p169 = scmp.lt.s32.totalorder %s168, 63
      %s170 = scalar_select %p169, %s168, 63
      %s171 = smul.addr %s170, 8
      %s172 = scalar_lea.vmem %s3, %s171
      %s173 = smul.u32 32, %s14
      %v175 = vld [vmem:[%s166] sm:$0xf]
      %v176 = vld [vmem:[%s166 + $0x4] sm:$0xf]
      %v177 = vld [vmem:[%s166 + $0x8] sm:$0xf]
      %v178 = vld [vmem:[%s166 + $0xc] sm:$0xf]
      %v179 = vld [vmem:[%s166 + $0x10] sm:$0xf]
      %v180 = vld [vmem:[%s166 + $0x14] sm:$0xf]
      %v181 = vld [vmem:[%s166 + $0x18] sm:$0xf]
      %v182 = vld [vmem:[%s166 + $0x1c] sm:$0xf]
      %v183 = vld [vmem:[%s166 + $0x20] sm:$0xf]
      %v184 = vld [vmem:[%s166 + $0x24] sm:$0xf]
      %v185 = vld [vmem:[%s166 + $0x28] sm:$0xf]
      %v186 = vld [vmem:[%s166 + $0x2c] sm:$0xf]
      %v187 = vld [vmem:[%s166 + $0x30] sm:$0xf]
      %v188 = vld [vmem:[%s166 + $0x34] sm:$0xf]
      %v189 = vld [vmem:[%s166 + $0x38] sm:$0xf]
      %v190 = vld [vmem:[%s166 + $0x3c] sm:$0xf]
      %v191 = vld [vmem:[%s166 + $0x40] sm:$0xf]
      %v192 = vld [vmem:[%s166 + $0x44] sm:$0xf]
      %v193 = vld [vmem:[%s166 + $0x48] sm:$0xf]
      %v194 = vld [vmem:[%s166 + $0x4c] sm:$0xf]
      %v195 = vld [vmem:[%s166 + $0x50] sm:$0xf]
      %v196 = vld [vmem:[%s166 + $0x54] sm:$0xf]
      %v197 = vld [vmem:[%s166 + $0x58] sm:$0xf]
      %v198 = vld [vmem:[%s166 + $0x5c] sm:$0xf]
      %v199 = vld [vmem:[%s166 + $0x60] sm:$0xf]
      %v200 = vld [vmem:[%s166 + $0x64] sm:$0xf]
      %v201 = vld [vmem:[%s166 + $0x68] sm:$0xf]
      %v202 = vld [vmem:[%s166 + $0x6c] sm:$0xf]
      %v203 = vld [vmem:[%s166 + $0x70] sm:$0xf]
      %v204 = vld [vmem:[%s166 + $0x74] sm:$0xf]
      %v205 = vld [vmem:[%s166 + $0x78] sm:$0xf]
      %v206 = vld [vmem:[%s166 + $0x7c] sm:$0xf]
      %v207 = vld [vmem:[%s1] sm:$0xf]
      %v208 = vld [vmem:[%s1 + $0x4] sm:$0xf]
      %v209 = vld [vmem:[%s1 + $0x8] sm:$0xf]
      %v210 = vld [vmem:[%s1 + $0xc] sm:$0xf]
      %v211 = vld [vmem:[%s1 + $0x10] sm:$0xf]
      %v212 = vld [vmem:[%s1 + $0x14] sm:$0xf]
      %v213 = vld [vmem:[%s1 + $0x18] sm:$0xf]
      %v214 = vld [vmem:[%s1 + $0x1c] sm:$0xf]
      %v215 = vld [vmem:[%s1 + $0x20] sm:$0xf]
      %v216 = vld [vmem:[%s1 + $0x24] sm:$0xf]
      %v217 = vld [vmem:[%s1 + $0x28] sm:$0xf]
      %v218 = vld [vmem:[%s1 + $0x2c] sm:$0xf]
      %v219 = vld [vmem:[%s1 + $0x30] sm:$0xf]
      %v220 = vld [vmem:[%s1 + $0x34] sm:$0xf]
      %v221 = vld [vmem:[%s1 + $0x38] sm:$0xf]
      %v222 = vld [vmem:[%s1 + $0x3c] sm:$0xf]
      %v223 = vld [vmem:[%s2] sm:$0x1]
      %v225 = vlaneseq
      %v226 = vshrl.u32 %v225, 7
      %v227 = vsub.s32 0, %v226
      %v228 = vrot.slane %v223, %v227
      %v262 = vunpack.c.l.b16 %v175
      %v263 = vunpack.c.l.b16 %v176
      %v264 = vunpack.c.l.b16 %v177
      %v265 = vunpack.c.l.b16 %v178
      %v266 = vunpack.c.l.b16 %v179
      %v267 = vunpack.c.l.b16 %v180
      %v268 = vunpack.c.l.b16 %v181
      %v269 = vunpack.c.l.b16 %v182
      %v270 = vunpack.c.l.b16 %v183
      %v271 = vunpack.c.l.b16 %v184
      %v272 = vunpack.c.l.b16 %v185
      %v273 = vunpack.c.l.b16 %v186
      %v274 = vunpack.c.l.b16 %v187
      %v275 = vunpack.c.l.b16 %v188
      %v276 = vunpack.c.l.b16 %v189
      %v277 = vunpack.c.l.b16 %v190
      %v278 = vunpack.c.l.b16 %v191
      %v279 = vunpack.c.l.b16 %v192
      %v280 = vunpack.c.l.b16 %v193
      %v281 = vunpack.c.l.b16 %v194
      %v282 = vunpack.c.l.b16 %v195
      %v283 = vunpack.c.l.b16 %v196
      %v284 = vunpack.c.l.b16 %v197
      %v285 = vunpack.c.l.b16 %v198
      %v286 = vunpack.c.l.b16 %v199
      %v287 = vunpack.c.l.b16 %v200
      %v288 = vunpack.c.l.b16 %v201
      %v289 = vunpack.c.l.b16 %v202
      %v290 = vunpack.c.l.b16 %v203
      %v291 = vunpack.c.l.b16 %v204
      %v292 = vunpack.c.l.b16 %v205
      %v293 = vunpack.c.l.b16 %v206
      %v294 = vpack.c.b16 %v263, %v262
      %v295 = vpack.c.b16 %v265, %v264
      %v296 = vpack.c.b16 %v267, %v266
      %v297 = vpack.c.b16 %v269, %v268
      %v298 = vpack.c.b16 %v271, %v270
      %v299 = vpack.c.b16 %v273, %v272
      %v300 = vpack.c.b16 %v275, %v274
      %v301 = vpack.c.b16 %v277, %v276
      %v302 = vpack.c.b16 %v279, %v278
      %v303 = vpack.c.b16 %v281, %v280
      %v304 = vpack.c.b16 %v283, %v282
      %v305 = vpack.c.b16 %v285, %v284
      %v306 = vpack.c.b16 %v287, %v286
      %v307 = vpack.c.b16 %v289, %v288
      %v308 = vpack.c.b16 %v291, %v290
      %v309 = vpack.c.b16 %v293, %v292
      %v342 = vunpack.c.l.b16 %v207
      %v343 = vunpack.c.l.b16 %v208
      %v344 = vunpack.c.l.b16 %v209
      %v345 = vunpack.c.l.b16 %v210
      %v346 = vunpack.c.l.b16 %v211
      %v347 = vunpack.c.l.b16 %v212
      %v348 = vunpack.c.l.b16 %v213
      %v349 = vunpack.c.l.b16 %v214
      %v350 = vunpack.c.l.b16 %v215
      %v351 = vunpack.c.l.b16 %v216
      %v352 = vunpack.c.l.b16 %v217
      %v353 = vunpack.c.l.b16 %v218
      %v354 = vunpack.c.l.b16 %v219
      %v355 = vunpack.c.l.b16 %v220
      %v356 = vunpack.c.l.b16 %v221
      %v357 = vunpack.c.l.b16 %v222
      %v358 = vpack.c.b16 %v343, %v342
      %v359 = vpack.c.b16 %v345, %v344
      %v360 = vpack.c.b16 %v347, %v346
      %v361 = vpack.c.b16 %v349, %v348
      %v362 = vpack.c.b16 %v351, %v350
      %v363 = vpack.c.b16 %v353, %v352
      %v364 = vpack.c.b16 %v355, %v354
      %v365 = vpack.c.b16 %v357, %v356
      %374 = vmatprep.subr.bf16.mxu0 0
      %375 = vmatpush1.bf16.msra.mxu0 %v365
      %376 = vmatprep.subr.bf16.mxu0 0
      %377 = vmatpush1.bf16.msra.mxu0 %v364
      %378 = vmatprep.subr.bf16.mxu0 0
      %379 = vmatpush1.bf16.msra.mxu0 %v363
      %380 = vmatprep.subr.bf16.mxu0 0
      %381 = vmatpush1.bf16.msra.mxu0 %v362
      %382 = vmatprep.subr.bf16.mxu0 0
      %383 = vmatpush1.bf16.msra.mxu0 %v361
      %384 = vmatprep.subr.bf16.mxu0 0
      %385 = vmatpush1.bf16.msra.mxu0 %v360
      %386 = vmatprep.subr.bf16.mxu0 0
      %387 = vmatpush1.bf16.msra.mxu0 %v359
      %388 = vmatprep.subr.bf16.mxu0 0
      %389 = vmatpush1.bf16.msra.mxu0 %v358
      %390 = vmatprep.subr.bf16.mxu0 0
      %391 = vmatpush2.bf16.msra.mxu0 0
      %392 = vmatprep.subr.bf16.mxu0 0
      %393 = vmatpush2.bf16.msra.mxu0 0
      %394 = vmatprep.subr.bf16.mxu0 0
      %395 = vmatpush2.bf16.msra.mxu0 0
      %396 = vmatprep.subr.bf16.mxu0 0
      %397 = vmatpush2.bf16.msra.mxu0 0
      %398 = vmatprep.subr.bf16.mxu0 0
      %399 = vmatpush2.bf16.msra.mxu0 0
      %400 = vmatprep.subr.bf16.mxu0 0
      %401 = vmatpush2.bf16.msra.mxu0 0
      %402 = vmatprep.subr.bf16.mxu0 0
      %403 = vmatpush2.bf16.msra.mxu0 0
      %404 = vmatprep.subr.bf16.mxu0 0
      %405 = vmatpush2.bf16.msra.mxu0 0
      %406 = vmatprep.mubr.bf16.mxu0 0
      %407 = vmatmul.mubr.bf16.gmra.mxu0 %v294
      %v408 = vpop.f32.mrf.mxu0
      %v409 = vadd.f32 %v228, %v408
      %v410 = vpop.f32.mrf.mxu0
      %v411 = vpop.f32.mrf.mxu0
      %v412 = vadd.f32 %v228, %v411
      %v413 = vpop.f32.mrf.mxu0
      %414 = vmatprep.mubr.bf16.mxu0 0
      %415 = vmatmul.mubr.bf16.gmra.mxu0 %v295
      %v416 = vpop.f32.mrf.mxu0
      %v417 = vadd.f32 %v228, %v416
      %v418 = vpop.f32.mrf.mxu0
      %v419 = vpop.f32.mrf.mxu0
      %v420 = vadd.f32 %v228, %v419
      %v421 = vpop.f32.mrf.mxu0
      %422 = vmatprep.mubr.bf16.mxu0 0
      %423 = vmatmul.mubr.bf16.gmra.mxu0 %v296
      %v424 = vpop.f32.mrf.mxu0
      %v425 = vadd.f32 %v228, %v424
      %v426 = vpop.f32.mrf.mxu0
      %v427 = vpop.f32.mrf.mxu0
      %v428 = vadd.f32 %v228, %v427
      %v429 = vpop.f32.mrf.mxu0
      %430 = vmatprep.mubr.bf16.mxu0 0
      %431 = vmatmul.mubr.bf16.gmra.mxu0 %v297
      %v432 = vpop.f32.mrf.mxu0
      %v433 = vadd.f32 %v228, %v432
      %v434 = vpop.f32.mrf.mxu0
      %v435 = vpop.f32.mrf.mxu0
      %v436 = vadd.f32 %v228, %v435
      %v437 = vpop.f32.mrf.mxu0
      %438 = vmatprep.mubr.bf16.mxu0 0
      %439 = vmatmul.mubr.bf16.gmra.mxu0 %v298
      %v440 = vpop.f32.mrf.mxu0
      %v441 = vadd.f32 %v228, %v440
      %v442 = vpop.f32.mrf.mxu0
      %v443 = vpop.f32.mrf.mxu0
      %v444 = vadd.f32 %v228, %v443
      %v445 = vpop.f32.mrf.mxu0
      %446 = vmatprep.mubr.bf16.mxu0 0
      %447 = vmatmul.mubr.bf16.gmra.mxu0 %v299
      %v448 = vpop.f32.mrf.mxu0
      %v449 = vadd.f32 %v228, %v448
      %v450 = vpop.f32.mrf.mxu0
      %v451 = vpop.f32.mrf.mxu0
      %v452 = vadd.f32 %v228, %v451
      %v453 = vpop.f32.mrf.mxu0
      %454 = vmatprep.mubr.bf16.mxu0 0
      %455 = vmatmul.mubr.bf16.gmra.mxu0 %v300
      %v456 = vpop.f32.mrf.mxu0
      %v457 = vadd.f32 %v228, %v456
      %v458 = vpop.f32.mrf.mxu0
      %v459 = vpop.f32.mrf.mxu0
      %v460 = vadd.f32 %v228, %v459
      %v461 = vpop.f32.mrf.mxu0
      %462 = vmatprep.mubr.bf16.mxu0 0
      %463 = vmatmul.mubr.bf16.gmra.mxu0 %v301
      %v464 = vpop.f32.mrf.mxu0
      %v465 = vadd.f32 %v228, %v464
      %v466 = vpop.f32.mrf.mxu0
      %v467 = vpop.f32.mrf.mxu0
      %v468 = vadd.f32 %v228, %v467
      %v469 = vpop.f32.mrf.mxu0
      %470 = vmatprep.mubr.bf16.mxu0 0
      %471 = vmatmul.mubr.bf16.gmra.mxu0 %v302
      %v472 = vpop.f32.mrf.mxu0
      %v473 = vadd.f32 %v228, %v472
      %v474 = vpop.f32.mrf.mxu0
      %v475 = vpop.f32.mrf.mxu0
      %v476 = vadd.f32 %v228, %v475
      %v477 = vpop.f32.mrf.mxu0
      %478 = vmatprep.mubr.bf16.mxu0 0
      %479 = vmatmul.mubr.bf16.gmra.mxu0 %v303
      %v480 = vpop.f32.mrf.mxu0
      %v481 = vadd.f32 %v228, %v480
      %v482 = vpop.f32.mrf.mxu0
      %v483 = vpop.f32.mrf.mxu0
      %v484 = vadd.f32 %v228, %v483
      %v485 = vpop.f32.mrf.mxu0
      %486 = vmatprep.mubr.bf16.mxu0 0
      %487 = vmatmul.mubr.bf16.gmra.mxu0 %v304
      %v488 = vpop.f32.mrf.mxu0
      %v489 = vadd.f32 %v228, %v488
      %v490 = vpop.f32.mrf.mxu0
      %v491 = vpop.f32.mrf.mxu0
      %v492 = vadd.f32 %v228, %v491
      %v493 = vpop.f32.mrf.mxu0
      %494 = vmatprep.mubr.bf16.mxu0 0
      %495 = vmatmul.mubr.bf16.gmra.mxu0 %v305
      %v496 = vpop.f32.mrf.mxu0
      %v497 = vadd.f32 %v228, %v496
      %v498 = vpop.f32.mrf.mxu0
      %v499 = vpop.f32.mrf.mxu0
      %v500 = vadd.f32 %v228, %v499
      %v501 = vpop.f32.mrf.mxu0
      %502 = vmatprep.mubr.bf16.mxu0 0
      %503 = vmatmul.mubr.bf16.gmra.mxu0 %v306
      %v504 = vpop.f32.mrf.mxu0
      %v505 = vadd.f32 %v228, %v504
      %v506 = vpop.f32.mrf.mxu0
      %v507 = vpop.f32.mrf.mxu0
      %v508 = vadd.f32 %v228, %v507
      %v509 = vpop.f32.mrf.mxu0
      %510 = vmatprep.mubr.bf16.mxu0 0
      %511 = vmatmul.mubr.bf16.gmra.mxu0 %v307
      %v512 = vpop.f32.mrf.mxu0
      %v513 = vadd.f32 %v228, %v512
      %v514 = vpop.f32.mrf.mxu0
      %v515 = vpop.f32.mrf.mxu0
      %v516 = vadd.f32 %v228, %v515
      %v517 = vpop.f32.mrf.mxu0
      %518 = vmatprep.mubr.bf16.mxu0 0
      %519 = vmatmul.mubr.bf16.gmra.mxu0 %v308
      %v520 = vpop.f32.mrf.mxu0
      %v521 = vadd.f32 %v228, %v520
      %v522 = vpop.f32.mrf.mxu0
      %v523 = vpop.f32.mrf.mxu0
      %v524 = vadd.f32 %v228, %v523
      %v525 = vpop.f32.mrf.mxu0
      %526 = vmatprep.mubr.bf16.mxu0 0
      %527 = vmatmul.mubr.bf16.gmra.mxu0 %v309
      %v528 = vpop.f32.mrf.mxu0
      %v529 = vadd.f32 %v228, %v528
      %v530 = vpop.f32.mrf.mxu0
      %v531 = vpop.f32.mrf.mxu0
      %v532 = vadd.f32 %v228, %v531
      %v533 = vpop.f32.mrf.mxu0
      %534 = vdwg.mxu0
      %535 = vst [vmem:[%s172] sm:$0xff] %v409
      %536 = vst [vmem:[%s172 + $0x8] sm:$0xff] %v412
      %537 = vst [vmem:[%s172 + $0x10] sm:$0xff] %v417
      %538 = vst [vmem:[%s172 + $0x18] sm:$0xff] %v420
      %539 = vst [vmem:[%s172 + $0x20] sm:$0xff] %v425
      %540 = vst [vmem:[%s172 + $0x28] sm:$0xff] %v428
      %541 = vst [vmem:[%s172 + $0x30] sm:$0xff] %v433
      %542 = vst [vmem:[%s172 + $0x38] sm:$0xff] %v436
      %543 = vst [vmem:[%s172 + $0x40] sm:$0xff] %v441
      %544 = vst [vmem:[%s172 + $0x48] sm:$0xff] %v444
      %545 = vst [vmem:[%s172 + $0x50] sm:$0xff] %v449
      %546 = vst [vmem:[%s172 + $0x58] sm:$0xff] %v452
      %547 = vst [vmem:[%s172 + $0x60] sm:$0xff] %v457
      %548 = vst [vmem:[%s172 + $0x68] sm:$0xff] %v460
      %549 = vst [vmem:[%s172 + $0x70] sm:$0xff] %v465
      %550 = vst [vmem:[%s172 + $0x78] sm:$0xff] %v468
      %551 = vst [vmem:[%s172 + $0x80] sm:$0xff] %v473
      %552 = vst [vmem:[%s172 + $0x88] sm:$0xff] %v476
      %553 = vst [vmem:[%s172 + $0x90] sm:$0xff] %v481
      %554 = vst [vmem:[%s172 + $0x98] sm:$0xff] %v484
      %555 = vst [vmem:[%s172 + $0xa0] sm:$0xff] %v489
      %556 = vst [vmem:[%s172 + $0xa8] sm:$0xff] %v492
      %557 = vst [vmem:[%s172 + $0xb0] sm:$0xff] %v497
      %558 = vst [vmem:[%s172 + $0xb8] sm:$0xff] %v500
      %559 = vst [vmem:[%s172 + $0xc0] sm:$0xff] %v505
      %560 = vst [vmem:[%s172 + $0xc8] sm:$0xff] %v508
      %561 = vst [vmem:[%s172 + $0xd0] sm:$0xff] %v513
      %562 = vst [vmem:[%s172 + $0xd8] sm:$0xff] %v516
      %563 = vst [vmem:[%s172 + $0xe0] sm:$0xff] %v521
      %564 = vst [vmem:[%s172 + $0xe8] sm:$0xff] %v524
      %565 = vst [vmem:[%s172 + $0xf0] sm:$0xff] %v529
      %566 = vst [vmem:[%s172 + $0xf8] sm:$0xff] %v532
      %s567 = smul.u32 32, %s14
      %p568 = scmp.lt.s32.totalorder %s567, 63
      %s569 = scalar_select %p568, %s567, 63
      %s570 = smul.addr %s569, 8
      %s571 = scalar_lea.vmem %s3, %s570
      // Predicated region
      $region33: #{forward.6} parent=31 // pred_check
        %p572 = pneg %p100
      $region34: #{forward.6} parent=31 // pred_check_branch
        %574 = sbr.rel (%p572) target = $region36
      $region35: #{forward.6} parent=31 // pred_region
        %s575 = smul.u32 32, %s14
      $region36: #{forward.6} parent=31 // pred_fallthru
        _
    $region32: #{forward.6} parent=5 // pred_fallthru
      _
    %p576 = scmp.le.s32.totalorder 2, %s9
    // Predicated region
    $region37: #{forward.6} parent=5 // pred_check
      %p577 = pneg %p576
    $region38: #{forward.6} parent=5 // pred_check_branch
      %579 = sbr.rel (%p577) target = $region40
    $region39: #{forward.6} parent=5 // pred_region
      %s580 = ssub.s32 %s9, 2
      // Predicated region
      $region41: #{forward.6} parent=39 // pred_check
        %p581 = pneg %p106
      $region42: #{forward.6} parent=39 // pred_check_branch
        %583 = sbr.rel (%p581) target = $region44
      $region43: #{forward.6} parent=39 // pred_region
        %s584 = smul.u32 32, %s15
        %p585 = scmp.lt.s32.totalorder %s584, 63
        %s586 = scalar_select %p585, %s584, 63
        %s587 = smul.addr %s586, 8
        %s588 = scalar_lea.vmem %s3, %s587
      $region44: #{forward.6} parent=39 // pred_fallthru
        _
    $region40: #{forward.6} parent=5 // pred_fallthru
      _
  $region6: #{forward.6} parent=0 // loop_footer
    %s13 = sadd.s32 1, %s9
  $region7: #{forward.6} parent=0 // loop_footer_branch
    %8 = sbr.rel target = $region3
  $region8: #{forward.6} parent=0 // loop_exit
    _

// kernel: forward.5
$region0: #{forward.5}
  #allocation0 [shape = 'u32[]', space=smem, size = 0x4, offset = 0x4, fixed_abs, tag = 'smem constant byte address 0x4 - core index']
  #allocation1 [shape = 'u32[144,128]{1,0:T(1,128)}', space=vmem, size = 0x12000, scoped, tag = 'internal scratch']
  %s0 = inlined_call_operand.vmem [shape: bf16[512,128], index: 0, kind: input, shape index: {}]
  %s1 = inlined_call_operand.vmem [shape: bf16[128,128], index: 1, kind: input, shape index: {}]
  %s2 = inlined_call_operand.vmem [shape: f32[1,128], index: 2, kind: input, shape index: {}]
  %s3 = inlined_call_operand.vmem [shape: bf16[512,128], index: 3, kind: output, shape index: {}]
  %s4 = sld [smem:[#allocation0]]
  $region45: #{forward.5} parent=0
    _
  %s6 = ssub.s32 1, %s4
  %s7 = scalar_select 0, %s6, %s4
  loop: start=0, step=1, limit=4
  $region2: #{forward.5} parent=0 // loop_pre_header
    _
  $region3: #{forward.5} parent=0 // loop_header
    %s9 = sphi 0, %s13
    %p10 = scmp.ge.s32.totalorder %s9, 4
    %s19 = sphi 0, %s21
    %s22 = sphi 0, %s19
    %s23 = sphi 0, %s22
    %s39 = sphi 0, %s23
    %s43 = sphi 0, %s43
    %s45 = sphi 0, %s43
    %s46 = sphi 0, %s45
    %s60 = sphi 0, %s46
    %s64 = sphi 0, %s64
    %s66 = sphi 0, %s64
    %s67 = sphi 0, %s66
    %s81 = sphi 0, %s67
    %s87 = sphi 0, %s89
    %s90 = sphi 0, %s87
    %s91 = sphi 0, %s90
    %s107 = sphi 0, %s91
  $region4: #{forward.5} parent=0 // loop_header_branch
    %12 = sbr.rel (%p10) target = $region8
  $region5: #{forward.5} parent=0 // loop_body
    %s14 = ssub.s32 %s9, 1
    %s15 = ssub.s32 %s9, 2
    %s16 = sadd.s32 %s9, 1
    %s17 = ssub.s32 %s9, %s16
    %p18 = scmp.eq.s32.totalorder %s17, 0
    %s20 = sadd.s32 %s19, 1
    %s21 = scalar_select %p18, %s19, %s20
    %p24 = pneg %p18
    %p25 = scmp.eq.s32.totalorder %s9, 1
    %p26 = por %p24, %p25
    %p27 = scmp.ne.s32.totalorder %s19, %s22
    %p28 = scmp.eq.s32.totalorder %s9, 0
    %p29 = por %p27, %p28
    %p30 = scmp.ne.s32.totalorder %s19, %s22
    %p31 = scmp.eq.s32.totalorder %s14, 1
    %p32 = por %p30, %p31
    %p33 = scmp.ne.s32.totalorder %s22, %s23
    %p34 = scmp.eq.s32.totalorder %s14, 0
    %p35 = por %p33, %p34
    %p36 = scmp.ne.s32.totalorder %s22, %s23
    %p37 = scmp.eq.s32.totalorder %s15, 1
    %p38 = por %p36, %p37
    %p40 = scmp.ne.s32.totalorder %s23, %s39
    %p41 = scmp.eq.s32.totalorder %s15, 0
    %p42 = por %p40, %p41
    %s44 = sadd.s32 %s43, 1
    %p47 = scmp.eq.s32.totalorder %s9, 1
    %p48 = scmp.ne.s32.totalorder %s43, %s45
    %p49 = scmp.eq.s32.totalorder %s9, 0
    %p50 = por %p48, %p49
    %p51 = scmp.ne.s32.totalorder %s43, %s45
    %p52 = scmp.eq.s32.totalorder %s14, 1
    %p53 = por %p51, %p52
    %p54 = scmp.ne.s32.totalorder %s45, %s46
    %p55 = scmp.eq.s32.totalorder %s14, 0
    %p56 = por %p54, %p55
    %p57 = scmp.ne.s32.totalorder %s45, %s46
    %p58 = scmp.eq.s32.totalorder %s15, 1
    %p59 = por %p57, %p58
    %p61 = scmp.ne.s32.totalorder %s46, %s60
    %p62 = scmp.eq.s32.totalorder %s15, 0
    %p63 = por %p61, %p62
    %s65 = sadd.s32 %s64, 1
    %p68 = scmp.eq.s32.totalorder %s9, 1
    %p69 = scmp.ne.s32.totalorder %s64, %s66
    %p70 = scmp.eq.s32.totalorder %s9, 0
    %p71 = por %p69, %p70
    %p72 = scmp.ne.s32.totalorder %s64, %s66
    %p73 = scmp.eq.s32.totalorder %s14, 1
    %p74 = por %p72, %p73
    %p75 = scmp.ne.s32.totalorder %s66, %s67
    %p76 = scmp.eq.s32.totalorder %s14, 0
    %p77 = por %p75, %p76
    %p78 = scmp.ne.s32.totalorder %s66, %s67
    %p79 = scmp.eq.s32.totalorder %s15, 1
    %p80 = por %p78, %p79
    %p82 = scmp.ne.s32.totalorder %s67, %s81
    %p83 = scmp.eq.s32.totalorder %s15, 0
    %p84 = por %p82, %p83
    %s85 = ssub.s32 %s9, %s16
    %p86 = scmp.eq.s32.totalorder %s85, 0
    %s88 = sadd.s32 %s87, 1
    %s89 = scalar_select %p86, %s87, %s88
    %p92 = pneg %p86
    %p93 = scmp.eq.s32.totalorder %s9, 1
    %p94 = por %p92, %p93
    %p95 = scmp.ne.s32.totalorder %s87, %s90
    %p96 = scmp.eq.s32.totalorder %s9, 0
    %p97 = por %p95, %p96
    %p98 = scmp.ne.s32.totalorder %s87, %s90
    %p99 = scmp.eq.s32.totalorder %s14, 1
    %p100 = por %p98, %p99
    %p101 = scmp.ne.s32.totalorder %s90, %s91
    %p102 = scmp.eq.s32.totalorder %s14, 0
    %p103 = por %p101, %p102
    %p104 = scmp.ne.s32.totalorder %s90, %s91
    %p105 = scmp.eq.s32.totalorder %s15, 1
    %p106 = por %p104, %p105
    %p108 = scmp.ne.s32.totalorder %s91, %s107
    %p109 = scmp.eq.s32.totalorder %s15, 0
    %p110 = por %p108, %p109
    %p111 = scmp.le.s32.totalorder 1, %s9
    %p112 = scmp.lt.s32.totalorder %s9, 3
    %p113 = pnand %p111, %p112
    %p114 = pneg %p113
    // Predicated region
    $region9: #{forward.5} parent=5 // pred_check
      _
    $region10: #{forward.5} parent=5 // pred_check_branch
      %116 = sbr.rel (%p113) target = $region12
    $region11: #{forward.5} parent=5 // pred_region
      %s117 = ssub.s32 %s9, 1
      // Predicated region
      $region13: #{forward.5} parent=11 // pred_check
        %p118 = pneg %p56
      $region14: #{forward.5} parent=11 // pred_check_branch
        %120 = sbr.rel (%p118) target = $region16
      $region15: #{forward.5} parent=11 // pred_region
        _
      $region16: #{forward.5} parent=11 // pred_fallthru
        _
      // Predicated region
      $region17: #{forward.5} parent=11 // pred_check
        %p121 = pneg %p77
      $region18: #{forward.5} parent=11 // pred_check_branch
        %123 = sbr.rel (%p121) target = $region20
      $region19: #{forward.5} parent=11 // pred_region
        _
      $region20: #{forward.5} parent=11 // pred_fallthru
        _
    $region12: #{forward.5} parent=5 // pred_fallthru
      _
    %p124 = scmp.lt.s32.totalorder %s9, 2
    // Predicated region
    $region21: #{forward.5} parent=5 // pred_check
      %p125 = pneg %p124
    $region22: #{forward.5} parent=5 // pred_check_branch
      %127 = sbr.rel (%p125) target = $region24
    $region23: #{forward.5} parent=5 // pred_region
      // Predicated region
      $region25: #{forward.5} parent=23 // pred_check
        %p128 = pneg %p29
      $region26: #{forward.5} parent=23 // pred_check_branch
        %130 = sbr.rel (%p128) target = $region28
      $region27: #{forward.5} parent=23 // pred_region
        %s131 = smul.u32 32, %s9
        %p132 = scmp.lt.s32.totalorder %s131, 63
        %s133 = scalar_select %p132, %s131, 63
        %s134 = smul.addr %s133, 4
        %s135 = scalar_lea.vmem %s0, %s134
        %s136 = smul.u32 32, %s9
      $region28: #{forward.5} parent=23 // pred_fallthru
        _
    $region24: #{forward.5} parent=5 // pred_fallthru
      _
    %p137 = scmp.le.s32.totalorder 1, %s9
    %p138 = scmp.lt.s32.totalorder %s9, 3
    %p139 = pnand %p137, %p138
    %p140 = pneg %p139
    // Predicated region
    $region29: #{forward.5} parent=5 // pred_check
      _
    $region30: #{forward.5} parent=5 // pred_check_branch
      %142 = sbr.rel (%p139) target = $region32
    $region31: #{forward.5} parent=5 // pred_region
      %s143 = ssub.s32 %s9, 1
      %s144 = smul.u32 32, %s14
      %p145 = scmp.lt.s32.totalorder %s144, 63
      %s146 = scalar_select %p145, %s144, 63
      %s147 = smul.addr %s146, 4
      %s148 = scalar_lea.vmem %s0, %s147
      %p149 = pneg %p35
      %p150 = pneg %p32
      %p151 = pneg %p56
      %p152 = pneg %p53
      %p153 = pneg %p77
      %p154 = pneg %p74
      %p155 = pneg %p103
      %p156 = pneg %p100
      %s157 = smul.u32 32, %s14
      %p158 = scmp.lt.s32.totalorder %s157, 63
      %s159 = scalar_select %p158, %s157, 63
      %s160 = smul.addr %s159, 4
      %s161 = scalar_lea.vmem %s3, %s160
      %s162 = smul.u32 32, %s14
      %p163 = scmp.lt.s32.totalorder %s162, 63
      %s164 = scalar_select %p163, %s162, 63
      %s165 = smul.addr %s164, 4
      %s166 = scalar_lea.vmem %s0, %s165
      %s167 = smul.u32 32, %s14
      %s168 = smul.u32 32, %s14
      %p169 = scmp.lt.s32.totalorder %s168, 63
      %s170 = scalar_select %p169, %s168, 63
      %s171 = smul.addr %s170, 4
      %s172 = scalar_lea.vmem %s3, %s171
      %s173 = smul.u32 32, %s14
      %v175 = vld [vmem:[%s166] sm:$0xf]
      %v176 = vld [vmem:[%s166 + $0x4] sm:$0xf]
      %v177 = vld [vmem:[%s166 + $0x8] sm:$0xf]
      %v178 = vld [vmem:[%s166 + $0xc] sm:$0xf]
      %v179 = vld [vmem:[%s166 + $0x10] sm:$0xf]
      %v180 = vld [vmem:[%s166 + $0x14] sm:$0xf]
      %v181 = vld [vmem:[%s166 + $0x18] sm:$0xf]
      %v182 = vld [vmem:[%s166 + $0x1c] sm:$0xf]
      %v183 = vld [vmem:[%s166 + $0x20] sm:$0xf]
      %v184 = vld [vmem:[%s166 + $0x24] sm:$0xf]
      %v185 = vld [vmem:[%s166 + $0x28] sm:$0xf]
      %v186 = vld [vmem:[%s166 + $0x2c] sm:$0xf]
      %v187 = vld [vmem:[%s166 + $0x30] sm:$0xf]
      %v188 = vld [vmem:[%s166 + $0x34] sm:$0xf]
      %v189 = vld [vmem:[%s166 + $0x38] sm:$0xf]
      %v190 = vld [vmem:[%s166 + $0x3c] sm:$0xf]
      %v191 = vld [vmem:[%s166 + $0x40] sm:$0xf]
      %v192 = vld [vmem:[%s166 + $0x44] sm:$0xf]
      %v193 = vld [vmem:[%s166 + $0x48] sm:$0xf]
      %v194 = vld [vmem:[%s166 + $0x4c] sm:$0xf]
      %v195 = vld [vmem:[%s166 + $0x50] sm:$0xf]
      %v196 = vld [vmem:[%s166 + $0x54] sm:$0xf]
      %v197 = vld [vmem:[%s166 + $0x58] sm:$0xf]
      %v198 = vld [vmem:[%s166 + $0x5c] sm:$0xf]
      %v199 = vld [vmem:[%s166 + $0x60] sm:$0xf]
      %v200 = vld [vmem:[%s166 + $0x64] sm:$0xf]
      %v201 = vld [vmem:[%s166 + $0x68] sm:$0xf]
      %v202 = vld [vmem:[%s166 + $0x6c] sm:$0xf]
      %v203 = vld [vmem:[%s166 + $0x70] sm:$0xf]
      %v204 = vld [vmem:[%s166 + $0x74] sm:$0xf]
      %v205 = vld [vmem:[%s166 + $0x78] sm:$0xf]
      %v206 = vld [vmem:[%s166 + $0x7c] sm:$0xf]
      %v207 = vld [vmem:[%s1] sm:$0xf]
      %v208 = vld [vmem:[%s1 + $0x4] sm:$0xf]
      %v209 = vld [vmem:[%s1 + $0x8] sm:$0xf]
      %v210 = vld [vmem:[%s1 + $0xc] sm:$0xf]
      %v211 = vld [vmem:[%s1 + $0x10] sm:$0xf]
      %v212 = vld [vmem:[%s1 + $0x14] sm:$0xf]
      %v213 = vld [vmem:[%s1 + $0x18] sm:$0xf]
      %v214 = vld [vmem:[%s1 + $0x1c] sm:$0xf]
      %v215 = vld [vmem:[%s1 + $0x20] sm:$0xf]
      %v216 = vld [vmem:[%s1 + $0x24] sm:$0xf]
      %v217 = vld [vmem:[%s1 + $0x28] sm:$0xf]
      %v218 = vld [vmem:[%s1 + $0x2c] sm:$0xf]
      %v219 = vld [vmem:[%s1 + $0x30] sm:$0xf]
      %v220 = vld [vmem:[%s1 + $0x34] sm:$0xf]
      %v221 = vld [vmem:[%s1 + $0x38] sm:$0xf]
      %v222 = vld [vmem:[%s1 + $0x3c] sm:$0xf]
      %v223 = vld [vmem:[%s2] sm:$0x1]
      %v225 = vlaneseq
      %v226 = vshrl.u32 %v225, 7
      %v227 = vsub.s32 0, %v226
      %v228 = vrot.slane %v223, %v227
      %v262 = vunpack.c.l.b16 %v175
      %v263 = vunpack.c.l.b16 %v176
      %v264 = vunpack.c.l.b16 %v177
      %v265 = vunpack.c.l.b16 %v178
      %v266 = vunpack.c.l.b16 %v179
      %v267 = vunpack.c.l.b16 %v180
      %v268 = vunpack.c.l.b16 %v181
      %v269 = vunpack.c.l.b16 %v182
      %v270 = vunpack.c.l.b16 %v183
      %v271 = vunpack.c.l.b16 %v184
      %v272 = vunpack.c.l.b16 %v185
      %v273 = vunpack.c.l.b16 %v186
      %v274 = vunpack.c.l.b16 %v187
      %v275 = vunpack.c.l.b16 %v188
      %v276 = vunpack.c.l.b16 %v189
      %v277 = vunpack.c.l.b16 %v190
      %v278 = vunpack.c.l.b16 %v191
      %v279 = vunpack.c.l.b16 %v192
      %v280 = vunpack.c.l.b16 %v193
      %v281 = vunpack.c.l.b16 %v194
      %v282 = vunpack.c.l.b16 %v195
      %v283 = vunpack.c.l.b16 %v196
      %v284 = vunpack.c.l.b16 %v197
      %v285 = vunpack.c.l.b16 %v198
      %v286 = vunpack.c.l.b16 %v199
      %v287 = vunpack.c.l.b16 %v200
      %v288 = vunpack.c.l.b16 %v201
      %v289 = vunpack.c.l.b16 %v202
      %v290 = vunpack.c.l.b16 %v203
      %v291 = vunpack.c.l.b16 %v204
      %v292 = vunpack.c.l.b16 %v205
      %v293 = vunpack.c.l.b16 %v206
      %v294 = vpack.c.b16 %v263, %v262
      %v295 = vpack.c.b16 %v265, %v264
      %v296 = vpack.c.b16 %v267, %v266
      %v297 = vpack.c.b16 %v269, %v268
      %v298 = vpack.c.b16 %v271, %v270
      %v299 = vpack.c.b16 %v273, %v272
      %v300 = vpack.c.b16 %v275, %v274
      %v301 = vpack.c.b16 %v277, %v276
      %v302 = vpack.c.b16 %v279, %v278
      %v303 = vpack.c.b16 %v281, %v280
      %v304 = vpack.c.b16 %v283, %v282
      %v305 = vpack.c.b16 %v285, %v284
      %v306 = vpack.c.b16 %v287, %v286
      %v307 = vpack.c.b16 %v289, %v288
      %v308 = vpack.c.b16 %v291, %v290
      %v309 = vpack.c.b16 %v293, %v292
      %v342 = vunpack.c.l.b16 %v207
      %v343 = vunpack.c.l.b16 %v208
      %v344 = vunpack.c.l.b16 %v209
      %v345 = vunpack.c.l.b16 %v210
      %v346 = vunpack.c.l.b16 %v211
      %v347 = vunpack.c.l.b16 %v212
      %v348 = vunpack.c.l.b16 %v213
      %v349 = vunpack.c.l.b16 %v214
      %v350 = vunpack.c.l.b16 %v215
      %v351 = vunpack.c.l.b16 %v216
      %v352 = vunpack.c.l.b16 %v217
      %v353 = vunpack.c.l.b16 %v218
      %v354 = vunpack.c.l.b16 %v219
      %v355 = vunpack.c.l.b16 %v220
      %v356 = vunpack.c.l.b16 %v221
      %v357 = vunpack.c.l.b16 %v222
      %v358 = vpack.c.b16 %v343, %v342
      %v359 = vpack.c.b16 %v345, %v344
      %v360 = vpack.c.b16 %v347, %v346
      %v361 = vpack.c.b16 %v349, %v348
      %v362 = vpack.c.b16 %v351, %v350
      %v363 = vpack.c.b16 %v353, %v352
      %v364 = vpack.c.b16 %v355, %v354
      %v365 = vpack.c.b16 %v357, %v356
      %374 = vmatprep.subr.bf16.mxu0 0
      %375 = vmatpush1.bf16.msra.mxu0 %v365
      %376 = vmatprep.subr.bf16.mxu0 0
      %377 = vmatpush1.bf16.msra.mxu0 %v364
      %378 = vmatprep.subr.bf16.mxu0 0
      %379 = vmatpush1.bf16.msra.mxu0 %v363
      %380 = vmatprep.subr.bf16.mxu0 0
      %381 = vmatpush1.bf16.msra.mxu0 %v362
      %382 = vmatprep.subr.bf16.mxu0 0
      %383 = vmatpush1.bf16.msra.mxu0 %v361
      %384 = vmatprep.subr.bf16.mxu0 0
      %385 = vmatpush1.bf16.msra.mxu0 %v360
      %386 = vmatprep.subr.bf16.mxu0 0
      %387 = vmatpush1.bf16.msra.mxu0 %v359
      %388 = vmatprep.subr.bf16.mxu0 0
      %389 = vmatpush1.bf16.msra.mxu0 %v358
      %390 = vmatprep.subr.bf16.mxu0 0
      %391 = vmatpush2.bf16.msra.mxu0 0
      %392 = vmatprep.subr.bf16.mxu0 0
      %393 = vmatpush2.bf16.msra.mxu0 0
      %394 = vmatprep.subr.bf16.mxu0 0
      %395 = vmatpush2.bf16.msra.mxu0 0
      %396 = vmatprep.subr.bf16.mxu0 0
      %397 = vmatpush2.bf16.msra.mxu0 0
      %398 = vmatprep.subr.bf16.mxu0 0
      %399 = vmatpush2.bf16.msra.mxu0 0
      %400 = vmatprep.subr.bf16.mxu0 0
      %401 = vmatpush2.bf16.msra.mxu0 0
      %402 = vmatprep.subr.bf16.mxu0 0
      %403 = vmatpush2.bf16.msra.mxu0 0
      %404 = vmatprep.subr.bf16.mxu0 0
      %405 = vmatpush2.bf16.msra.mxu0 0
      %406 = vmatprep.mubr.bf16.mxu0 0
      %407 = vmatmul.mubr.bf16.gmra.mxu0 %v294
      %v408 = vpop.f32.mrf.mxu0
      %v409 = vadd.f32 %v228, %v408
      %v410 = vpop.f32.mrf.mxu0
      %v411 = vpop.f32.mrf.mxu0
      %v412 = vadd.f32 %v228, %v411
      %v413 = vpop.f32.mrf.mxu0
      %414 = vmatprep.mubr.bf16.mxu0 0
      %415 = vmatmul.mubr.bf16.gmra.mxu0 %v295
      %v416 = vpop.f32.mrf.mxu0
      %v417 = vadd.f32 %v228, %v416
      %v418 = vpop.f32.mrf.mxu0
      %v419 = vpop.f32.mrf.mxu0
      %v420 = vadd.f32 %v228, %v419
      %v421 = vpop.f32.mrf.mxu0
      %422 = vmatprep.mubr.bf16.mxu0 0
      %423 = vmatmul.mubr.bf16.gmra.mxu0 %v296
      %v424 = vpop.f32.mrf.mxu0
      %v425 = vadd.f32 %v228, %v424
      %v426 = vpop.f32.mrf.mxu0
      %v427 = vpop.f32.mrf.mxu0
      %v428 = vadd.f32 %v228, %v427
      %v429 = vpop.f32.mrf.mxu0
      %430 = vmatprep.mubr.bf16.mxu0 0
      %431 = vmatmul.mubr.bf16.gmra.mxu0 %v297
      %v432 = vpop.f32.mrf.mxu0
      %v433 = vadd.f32 %v228, %v432
      %v434 = vpop.f32.mrf.mxu0
      %v435 = vpop.f32.mrf.mxu0
      %v436 = vadd.f32 %v228, %v435
      %v437 = vpop.f32.mrf.mxu0
      %438 = vmatprep.mubr.bf16.mxu0 0
      %439 = vmatmul.mubr.bf16.gmra.mxu0 %v298
      %v440 = vpop.f32.mrf.mxu0
      %v441 = vadd.f32 %v228, %v440
      %v442 = vpop.f32.mrf.mxu0
      %v443 = vpop.f32.mrf.mxu0
      %v444 = vadd.f32 %v228, %v443
      %v445 = vpop.f32.mrf.mxu0
      %446 = vmatprep.mubr.bf16.mxu0 0
      %447 = vmatmul.mubr.bf16.gmra.mxu0 %v299
      %v448 = vpop.f32.mrf.mxu0
      %v449 = vadd.f32 %v228, %v448
      %v450 = vpop.f32.mrf.mxu0
      %v451 = vpop.f32.mrf.mxu0
      %v452 = vadd.f32 %v228, %v451
      %v453 = vpop.f32.mrf.mxu0
      %454 = vmatprep.mubr.bf16.mxu0 0
      %455 = vmatmul.mubr.bf16.gmra.mxu0 %v300
      %v456 = vpop.f32.mrf.mxu0
      %v457 = vadd.f32 %v228, %v456
      %v458 = vpop.f32.mrf.mxu0
      %v459 = vpop.f32.mrf.mxu0
      %v460 = vadd.f32 %v228, %v459
      %v461 = vpop.f32.mrf.mxu0
      %462 = vmatprep.mubr.bf16.mxu0 0
      %463 = vmatmul.mubr.bf16.gmra.mxu0 %v301
      %v464 = vpop.f32.mrf.mxu0
      %v465 = vadd.f32 %v228, %v464
      %v466 = vpop.f32.mrf.mxu0
      %v467 = vpop.f32.mrf.mxu0
      %v468 = vadd.f32 %v228, %v467
      %v469 = vpop.f32.mrf.mxu0
      %470 = vmatprep.mubr.bf16.mxu0 0
      %471 = vmatmul.mubr.bf16.gmra.mxu0 %v302
      %v472 = vpop.f32.mrf.mxu0
      %v473 = vadd.f32 %v228, %v472
      %v474 = vpop.f32.mrf.mxu0
      %v475 = vpop.f32.mrf.mxu0
      %v476 = vadd.f32 %v228, %v475
      %v477 = vpop.f32.mrf.mxu0
      %478 = vmatprep.mubr.bf16.mxu0 0
      %479 = vmatmul.mubr.bf16.gmra.mxu0 %v303
      %v480 = vpop.f32.mrf.mxu0
      %v481 = vadd.f32 %v228, %v480
      %v482 = vpop.f32.mrf.mxu0
      %v483 = vpop.f32.mrf.mxu0
      %v484 = vadd.f32 %v228, %v483
      %v485 = vpop.f32.mrf.mxu0
      %486 = vmatprep.mubr.bf16.mxu0 0
      %487 = vmatmul.mubr.bf16.gmra.mxu0 %v304
      %v488 = vpop.f32.mrf.mxu0
      %v489 = vadd.f32 %v228, %v488
      %v490 = vpop.f32.mrf.mxu0
      %v491 = vpop.f32.mrf.mxu0
      %v492 = vadd.f32 %v228, %v491
      %v493 = vpop.f32.mrf.mxu0
      %494 = vmatprep.mubr.bf16.mxu0 0
      %495 = vmatmul.mubr.bf16.gmra.mxu0 %v305
      %v496 = vpop.f32.mrf.mxu0
      %v497 = vadd.f32 %v228, %v496
      %v498 = vpop.f32.mrf.mxu0
      %v499 = vpop.f32.mrf.mxu0
      %v500 = vadd.f32 %v228, %v499
      %v501 = vpop.f32.mrf.mxu0
      %502 = vmatprep.mubr.bf16.mxu0 0
      %503 = vmatmul.mubr.bf16.gmra.mxu0 %v306
      %v504 = vpop.f32.mrf.mxu0
      %v505 = vadd.f32 %v228, %v504
      %v506 = vpop.f32.mrf.mxu0
      %v507 = vpop.f32.mrf.mxu0
      %v508 = vadd.f32 %v228, %v507
      %v509 = vpop.f32.mrf.mxu0
      %510 = vmatprep.mubr.bf16.mxu0 0
      %511 = vmatmul.mubr.bf16.gmra.mxu0 %v307
      %v512 = vpop.f32.mrf.mxu0
      %v513 = vadd.f32 %v228, %v512
      %v514 = vpop.f32.mrf.mxu0
      %v515 = vpop.f32.mrf.mxu0
      %v516 = vadd.f32 %v228, %v515
      %v517 = vpop.f32.mrf.mxu0
      %518 = vmatprep.mubr.bf16.mxu0 0
      %519 = vmatmul.mubr.bf16.gmra.mxu0 %v308
      %v520 = vpop.f32.mrf.mxu0
      %v521 = vadd.f32 %v228, %v520
      %v522 = vpop.f32.mrf.mxu0
      %v523 = vpop.f32.mrf.mxu0
      %v524 = vadd.f32 %v228, %v523
      %v525 = vpop.f32.mrf.mxu0
      %526 = vmatprep.mubr.bf16.mxu0 0
      %527 = vmatmul.mubr.bf16.gmra.mxu0 %v309
      %v528 = vpop.f32.mrf.mxu0
      %v529 = vadd.f32 %v228, %v528
      %v530 = vpop.f32.mrf.mxu0
      %v531 = vpop.f32.mrf.mxu0
      %v532 = vadd.f32 %v228, %v531
      %v533 = vpop.f32.mrf.mxu0
      %534 = vdwg.mxu0
      %v535 = vmax.f32 %v409, 0.0
      %v536 = vmax.f32 %v412, 0.0
      %v537 = vmax.f32 %v417, 0.0
      %v538 = vmax.f32 %v420, 0.0
      %v539 = vmax.f32 %v425, 0.0
      %v540 = vmax.f32 %v428, 0.0
      %v541 = vmax.f32 %v433, 0.0
      %v542 = vmax.f32 %v436, 0.0
      %v543 = vmax.f32 %v441, 0.0
      %v544 = vmax.f32 %v444, 0.0
      %v545 = vmax.f32 %v449, 0.0
      %v546 = vmax.f32 %v452, 0.0
      %v547 = vmax.f32 %v457, 0.0
      %v548 = vmax.f32 %v460, 0.0
      %v549 = vmax.f32 %v465, 0.0
      %v550 = vmax.f32 %v468, 0.0
      %v551 = vmax.f32 %v473, 0.0
      %v552 = vmax.f32 %v476, 0.0
      %v553 = vmax.f32 %v481, 0.0
      %v554 = vmax.f32 %v484, 0.0
      %v555 = vmax.f32 %v489, 0.0
      %v556 = vmax.f32 %v492, 0.0
      %v557 = vmax.f32 %v497, 0.0
      %v558 = vmax.f32 %v500, 0.0
      %v559 = vmax.f32 %v505, 0.0
      %v560 = vmax.f32 %v508, 0.0
      %v561 = vmax.f32 %v513, 0.0
      %v562 = vmax.f32 %v516, 0.0
      %v563 = vmax.f32 %v521, 0.0
      %v564 = vmax.f32 %v524, 0.0
      %v565 = vmax.f32 %v529, 0.0
      %v566 = vmax.f32 %v532, 0.0
      %v567 = vpack.c.bf16 %v536, %v535
      %v568 = vpack.c.bf16 %v538, %v537
      %v569 = vpack.c.bf16 %v540, %v539
      %v570 = vpack.c.bf16 %v542, %v541
      %v571 = vpack.c.bf16 %v544, %v543
      %v572 = vpack.c.bf16 %v546, %v545
      %v573 = vpack.c.bf16 %v548, %v547
      %v574 = vpack.c.bf16 %v550, %v549
      %v575 = vpack.c.bf16 %v552, %v551
      %v576 = vpack.c.bf16 %v554, %v553
      %v577 = vpack.c.bf16 %v556, %v555
      %v578 = vpack.c.bf16 %v558, %v557
      %v579 = vpack.c.bf16 %v560, %v559
      %v580 = vpack.c.bf16 %v562, %v561
      %v581 = vpack.c.bf16 %v564, %v563
      %v582 = vpack.c.bf16 %v566, %v565
      %v599 = vunpack.c.l.b16 %v567
      %v600 = vunpack.c.h.b16 %v567
      %v601 = vunpack.c.l.b16 %v568
      %v602 = vunpack.c.h.b16 %v568
      %v603 = vunpack.c.l.b16 %v569
      %v604 = vunpack.c.h.b16 %v569
      %v605 = vunpack.c.l.b16 %v570
      %v606 = vunpack.c.h.b16 %v570
      %v607 = vunpack.c.l.b16 %v571
      %v608 = vunpack.c.h.b16 %v571
      %v609 = vunpack.c.l.b16 %v572
      %v610 = vunpack.c.h.b16 %v572
      %v611 = vunpack.c.l.b16 %v573
      %v612 = vunpack.c.h.b16 %v573
      %v613 = vunpack.c.l.b16 %v574
      %v614 = vunpack.c.h.b16 %v574
      %v615 = vunpack.c.l.b16 %v575
      %v616 = vunpack.c.h.b16 %v575
      %v617 = vunpack.c.l.b16 %v576
      %v618 = vunpack.c.h.b16 %v576
      %v619 = vunpack.c.l.b16 %v577
      %v620 = vunpack.c.h.b16 %v577
      %v621 = vunpack.c.l.b16 %v578
      %v622 = vunpack.c.h.b16 %v578
      %v623 = vunpack.c.l.b16 %v579
      %v624 = vunpack.c.h.b16 %v579
      %v625 = vunpack.c.l.b16 %v580
      %v626 = vunpack.c.h.b16 %v580
      %v627 = vunpack.c.l.b16 %v581
      %v628 = vunpack.c.h.b16 %v581
      %v629 = vunpack.c.l.b16 %v582
      %v630 = vunpack.c.h.b16 %v582
      %v631 = vpack.c.b16 %v599, %v599
      %v632 = vpack.c.b16 %v600, %v600
      %v633 = vpack.c.b16 %v601, %v601
      %v634 = vpack.c.b16 %v602, %v602
      %v635 = vpack.c.b16 %v603, %v603
      %v636 = vpack.c.b16 %v604, %v604
      %v637 = vpack.c.b16 %v605, %v605
      %v638 = vpack.c.b16 %v606, %v606
      %v639 = vpack.c.b16 %v607, %v607
      %v640 = vpack.c.b16 %v608, %v608
      %v641 = vpack.c.b16 %v609, %v609
      %v642 = vpack.c.b16 %v610, %v610
      %v643 = vpack.c.b16 %v611, %v611
      %v644 = vpack.c.b16 %v612, %v612
      %v645 = vpack.c.b16 %v613, %v613
      %v646 = vpack.c.b16 %v614, %v614
      %v647 = vpack.c.b16 %v615, %v615
      %v648 = vpack.c.b16 %v616, %v616
      %v649 = vpack.c.b16 %v617, %v617
      %v650 = vpack.c.b16 %v618, %v618
      %v651 = vpack.c.b16 %v619, %v619
      %v652 = vpack.c.b16 %v620, %v620
      %v653 = vpack.c.b16 %v621, %v621
      %v654 = vpack.c.b16 %v622, %v622
      %v655 = vpack.c.b16 %v623, %v623
      %v656 = vpack.c.b16 %v624, %v624
      %v657 = vpack.c.b16 %v625, %v625
      %v658 = vpack.c.b16 %v626, %v626
      %v659 = vpack.c.b16 %v627, %v627
      %v660 = vpack.c.b16 %v628, %v628
      %v661 = vpack.c.b16 %v629, %v629
      %v662 = vpack.c.b16 %v630, %v630
      %695 = vst [vmem:[%s172] sm:$0xf] %v631
      %696 = vst [vmem:[%s172 + $0x4] sm:$0xf] %v632
      %697 = vst [vmem:[%s172 + $0x8] sm:$0xf] %v633
      %698 = vst [vmem:[%s172 + $0xc] sm:$0xf] %v634
      %699 = vst [vmem:[%s172 + $0x10] sm:$0xf] %v635
      %700 = vst [vmem:[%s172 + $0x14] sm:$0xf] %v636
      %701 = vst [vmem:[%s172 + $0x18] sm:$0xf] %v637
      %702 = vst [vmem:[%s172 + $0x1c] sm:$0xf] %v638
      %703 = vst [vmem:[%s172 + $0x20] sm:$0xf] %v639
      %704 = vst [vmem:[%s172 + $0x24] sm:$0xf] %v640
      %705 = vst [vmem:[%s172 + $0x28] sm:$0xf] %v641
      %706 = vst [vmem:[%s172 + $0x2c] sm:$0xf] %v642
      %707 = vst [vmem:[%s172 + $0x30] sm:$0xf] %v643
      %708 = vst [vmem:[%s172 + $0x34] sm:$0xf] %v644
      %709 = vst [vmem:[%s172 + $0x38] sm:$0xf] %v645
      %710 = vst [vmem:[%s172 + $0x3c] sm:$0xf] %v646
      %711 = vst [vmem:[%s172 + $0x40] sm:$0xf] %v647
      %712 = vst [vmem:[%s172 + $0x44] sm:$0xf] %v648
      %713 = vst [vmem:[%s172 + $0x48] sm:$0xf] %v649
      %714 = vst [vmem:[%s172 + $0x4c] sm:$0xf] %v650
      %715 = vst [vmem:[%s172 + $0x50] sm:$0xf] %v651
      %716 = vst [vmem:[%s172 + $0x54] sm:$0xf] %v652
      %717 = vst [vmem:[%s172 + $0x58] sm:$0xf] %v653
      %718 = vst [vmem:[%s172 + $0x5c] sm:$0xf] %v654
      %719 = vst [vmem:[%s172 + $0x60] sm:$0xf] %v655
      %720 = vst [vmem:[%s172 + $0x64] sm:$0xf] %v656
      %721 = vst [vmem:[%s172 + $0x68] sm:$0xf] %v657
      %722 = vst [vmem:[%s172 + $0x6c] sm:$0xf] %v658
      %723 = vst [vmem:[%s172 + $0x70] sm:$0xf] %v659
      %724 = vst [vmem:[%s172 + $0x74] sm:$0xf] %v660
      %725 = vst [vmem:[%s172 + $0x78] sm:$0xf] %v661
      %726 = vst [vmem:[%s172 + $0x7c] sm:$0xf] %v662
      %s727 = smul.u32 32, %s14
      %p728 = scmp.lt.s32.totalorder %s727, 63
      %s729 = scalar_select %p728, %s727, 63
      %s730 = smul.addr %s729, 4
      %s731 = scalar_lea.vmem %s3, %s730
      // Predicated region
      $region33: #{forward.5} parent=31 // pred_check
        %p732 = pneg %p100
      $region34: #{forward.5} parent=31 // pred_check_branch
        %734 = sbr.rel (%p732) target = $region36
      $region35: #{forward.5} parent=31 // pred_region
        %s735 = smul.u32 32, %s14
      $region36: #{forward.5} parent=31 // pred_fallthru
        _
    $region32: #{forward.5} parent=5 // pred_fallthru
      _
    %p736 = scmp.le.s32.totalorder 2, %s9
    // Predicated region
    $region37: #{forward.5} parent=5 // pred_check
      %p737 = pneg %p736
    $region38: #{forward.5} parent=5 // pred_check_branch
      %739 = sbr.rel (%p737) target = $region40
    $region39: #{forward.5} parent=5 // pred_region
      %s740 = ssub.s32 %s9, 2
      // Predicated region
      $region41: #{forward.5} parent=39 // pred_check
        %p741 = pneg %p106
      $region42: #{forward.5} parent=39 // pred_check_branch
        %743 = sbr.rel (%p741) target = $region44
      $region43: #{forward.5} parent=39 // pred_region
        %s744 = smul.u32 32, %s15
        %p745 = scmp.lt.s32.totalorder %s744, 63
        %s746 = scalar_select %p745, %s744, 63
        %s747 = smul.addr %s746, 4
        %s748 = scalar_lea.vmem %s3, %s747
      $region44: #{forward.5} parent=39 // pred_fallthru
        _
    $region40: #{forward.5} parent=5 // pred_fallthru
      _
  $region6: #{forward.5} parent=0 // loop_footer
    %s13 = sadd.s32 1, %s9
  $region7: #{forward.5} parent=0 // loop_footer_branch
    %8 = sbr.rel target = $region3
  $region8: #{forward.5} parent=0 // loop_exit
    _

// kernel: forward.7
$region0: #{forward.7}
  #allocation0 [shape = 'u32[]', space=smem, size = 0x4, offset = 0x4, fixed_abs, tag = 'smem constant byte address 0x4 - core index']
  #allocation1 [shape = 'u32[144,128]{1,0:T(1,128)}', space=vmem, size = 0x12000, scoped, tag = 'internal scratch']
  %s0 = inlined_call_operand.vmem [shape: bf16[512,256], index: 0, kind: input, shape index: {}]
  %s1 = inlined_call_operand.vmem [shape: bf16[256,128], index: 1, kind: input, shape index: {}]
  %s2 = inlined_call_operand.vmem [shape: f32[1,128], index: 2, kind: input, shape index: {}]
  %s3 = inlined_call_operand.vmem [shape: f32[512,128], index: 3, kind: input, shape index: {}]
  %s4 = inlined_call_operand.vmem [shape: f32[512,128], index: 4, kind: output, shape index: {}]
  %s5 = sld [smem:[#allocation0]]
  $region49: #{forward.7} parent=0
    _
  %s7 = ssub.s32 1, %s5
  %s8 = scalar_select 0, %s7, %s5
  loop: start=0, step=1, limit=4
  $region2: #{forward.7} parent=0 // loop_pre_header
    _
  $region3: #{forward.7} parent=0 // loop_header
    %s10 = sphi 0, %s14
    %p11 = scmp.ge.s32.totalorder %s10, 4
    %s20 = sphi 0, %s22
    %s23 = sphi 0, %s20
    %s24 = sphi 0, %s23
    %s40 = sphi 0, %s24
    %s44 = sphi 0, %s44
    %s46 = sphi 0, %s44
    %s47 = sphi 0, %s46
    %s61 = sphi 0, %s47
    %s65 = sphi 0, %s65
    %s67 = sphi 0, %s65
    %s68 = sphi 0, %s67
    %s82 = sphi 0, %s68
    %s88 = sphi 0, %s90
    %s91 = sphi 0, %s88
    %s92 = sphi 0, %s91
    %s108 = sphi 0, %s92
    %s114 = sphi 0, %s116
    %s117 = sphi 0, %s114
    %s118 = sphi 0, %s117
    %s134 = sphi 0, %s118
  $region4: #{forward.7} parent=0 // loop_header_branch
    %13 = sbr.rel (%p11) target = $region8
  $region5: #{forward.7} parent=0 // loop_body
    %s15 = ssub.s32 %s10, 1
    %s16 = ssub.s32 %s10, 2
    %s17 = sadd.s32 %s10, 1
    %s18 = ssub.s32 %s10, %s17
    %p19 = scmp.eq.s32.totalorder %s18, 0
    %s21 = sadd.s32 %s20, 1
    %s22 = scalar_select %p19, %s20, %s21
    %p25 = pneg %p19
    %p26 = scmp.eq.s32.totalorder %s10, 1
    %p27 = por %p25, %p26
    %p28 = scmp.ne.s32.totalorder %s20, %s23
    %p29 = scmp.eq.s32.totalorder %s10, 0
    %p30 = por %p28, %p29
    %p31 = scmp.ne.s32.totalorder %s20, %s23
    %p32 = scmp.eq.s32.totalorder %s15, 1
    %p33 = por %p31, %p32
    %p34 = scmp.ne.s32.totalorder %s23, %s24
    %p35 = scmp.eq.s32.totalorder %s15, 0
    %p36 = por %p34, %p35
    %p37 = scmp.ne.s32.totalorder %s23, %s24
    %p38 = scmp.eq.s32.totalorder %s16, 1
    %p39 = por %p37, %p38
    %p41 = scmp.ne.s32.totalorder %s24, %s40
    %p42 = scmp.eq.s32.totalorder %s16, 0
    %p43 = por %p41, %p42
    %s45 = sadd.s32 %s44, 1
    %p48 = scmp.eq.s32.totalorder %s10, 1
    %p49 = scmp.ne.s32.totalorder %s44, %s46
    %p50 = scmp.eq.s32.totalorder %s10, 0
    %p51 = por %p49, %p50
    %p52 = scmp.ne.s32.totalorder %s44, %s46
    %p53 = scmp.eq.s32.totalorder %s15, 1
    %p54 = por %p52, %p53
    %p55 = scmp.ne.s32.totalorder %s46, %s47
    %p56 = scmp.eq.s32.totalorder %s15, 0
    %p57 = por %p55, %p56
    %p58 = scmp.ne.s32.totalorder %s46, %s47
    %p59 = scmp.eq.s32.totalorder %s16, 1
    %p60 = por %p58, %p59
    %p62 = scmp.ne.s32.totalorder %s47, %s61
    %p63 = scmp.eq.s32.totalorder %s16, 0
    %p64 = por %p62, %p63
    %s66 = sadd.s32 %s65, 1
    %p69 = scmp.eq.s32.totalorder %s10, 1
    %p70 = scmp.ne.s32.totalorder %s65, %s67
    %p71 = scmp.eq.s32.totalorder %s10, 0
    %p72 = por %p70, %p71
    %p73 = scmp.ne.s32.totalorder %s65, %s67
    %p74 = scmp.eq.s32.totalorder %s15, 1
    %p75 = por %p73, %p74
    %p76 = scmp.ne.s32.totalorder %s67, %s68
    %p77 = scmp.eq.s32.totalorder %s15, 0
    %p78 = por %p76, %p77
    %p79 = scmp.ne.s32.totalorder %s67, %s68
    %p80 = scmp.eq.s32.totalorder %s16, 1
    %p81 = por %p79, %p80
    %p83 = scmp.ne.s32.totalorder %s68, %s82
    %p84 = scmp.eq.s32.totalorder %s16, 0
    %p85 = por %p83, %p84
    %s86 = ssub.s32 %s10, %s17
    %p87 = scmp.eq.s32.totalorder %s86, 0
    %s89 = sadd.s32 %s88, 1
    %s90 = scalar_select %p87, %s88, %s89
    %p93 = pneg %p87
    %p94 = scmp.eq.s32.totalorder %s10, 1
    %p95 = por %p93, %p94
    %p96 = scmp.ne.s32.totalorder %s88, %s91
    %p97 = scmp.eq.s32.totalorder %s10, 0
    %p98 = por %p96, %p97
    %p99 = scmp.ne.s32.totalorder %s88, %s91
    %p100 = scmp.eq.s32.totalorder %s15, 1
    %p101 = por %p99, %p100
    %p102 = scmp.ne.s32.totalorder %s91, %s92
    %p103 = scmp.eq.s32.totalorder %s15, 0
    %p104 = por %p102, %p103
    %p105 = scmp.ne.s32.totalorder %s91, %s92
    %p106 = scmp.eq.s32.totalorder %s16, 1
    %p107 = por %p105, %p106
    %p109 = scmp.ne.s32.totalorder %s92, %s108
    %p110 = scmp.eq.s32.totalorder %s16, 0
    %p111 = por %p109, %p110
    %s112 = ssub.s32 %s10, %s17
    %p113 = scmp.eq.s32.totalorder %s112, 0
    %s115 = sadd.s32 %s114, 1
    %s116 = scalar_select %p113, %s114, %s115
    %p119 = pneg %p113
    %p120 = scmp.eq.s32.totalorder %s10, 1
    %p121 = por %p119, %p120
    %p122 = scmp.ne.s32.totalorder %s114, %s117
    %p123 = scmp.eq.s32.totalorder %s10, 0
    %p124 = por %p122, %p123
    %p125 = scmp.ne.s32.totalorder %s114, %s117
    %p126 = scmp.eq.s32.totalorder %s15, 1
    %p127 = por %p125, %p126
    %p128 = scmp.ne.s32.totalorder %s117, %s118
    %p129 = scmp.eq.s32.totalorder %s15, 0
    %p130 = por %p128, %p129
    %p131 = scmp.ne.s32.totalorder %s117, %s118
    %p132 = scmp.eq.s32.totalorder %s16, 1
    %p133 = por %p131, %p132
    %p135 = scmp.ne.s32.totalorder %s118, %s134
    %p136 = scmp.eq.s32.totalorder %s16, 0
    %p137 = por %p135, %p136
    %p138 = scmp.le.s32.totalorder 1, %s10
    %p139 = scmp.lt.s32.totalorder %s10, 3
    %p140 = pnand %p138, %p139
    %p141 = pneg %p140
    // Predicated region
    $region9: #{forward.7} parent=5 // pred_check
      _
    $region10: #{forward.7} parent=5 // pred_check_branch
      %143 = sbr.rel (%p140) target = $region12
    $region11: #{forward.7} parent=5 // pred_region
      %s144 = ssub.s32 %s10, 1
      // Predicated region
      $region13: #{forward.7} parent=11 // pred_check
        %p145 = pneg %p57
      $region14: #{forward.7} parent=11 // pred_check_branch
        %147 = sbr.rel (%p145) target = $region16
      $region15: #{forward.7} parent=11 // pred_region
        _
      $region16: #{forward.7} parent=11 // pred_fallthru
        _
      // Predicated region
      $region17: #{forward.7} parent=11 // pred_check
        %p148 = pneg %p78
      $region18: #{forward.7} parent=11 // pred_check_branch
        %150 = sbr.rel (%p148) target = $region20
      $region19: #{forward.7} parent=11 // pred_region
        _
      $region20: #{forward.7} parent=11 // pred_fallthru
        _
    $region12: #{forward.7} parent=5 // pred_fallthru
      _
    %p151 = scmp.lt.s32.totalorder %s10, 2
    // Predicated region
    $region21: #{forward.7} parent=5 // pred_check
      %p152 = pneg %p151
    $region22: #{forward.7} parent=5 // pred_check_branch
      %154 = sbr.rel (%p152) target = $region24
    $region23: #{forward.7} parent=5 // pred_region
      // Predicated region
      $region25: #{forward.7} parent=23 // pred_check
        %p155 = pneg %p30
      $region26: #{forward.7} parent=23 // pred_check_branch
        %157 = sbr.rel (%p155) target = $region28
      $region27: #{forward.7} parent=23 // pred_region
        %s158 = smul.u32 32, %s10
        %p159 = scmp.lt.s32.totalorder %s158, 63
        %s160 = scalar_select %p159, %s158, 63
        %s161 = smul.addr %s160, 2
        %s162 = smul.addr %s161, 4
        %s163 = scalar_lea.vmem %s0, %s162
        %s164 = smul.u32 32, %s10
      $region28: #{forward.7} parent=23 // pred_fallthru
        _
      // Predicated region
      $region29: #{forward.7} parent=23 // pred_check
        %p165 = pneg %p98
      $region30: #{forward.7} parent=23 // pred_check_branch
        %167 = sbr.rel (%p165) target = $region32
      $region31: #{forward.7} parent=23 // pred_region
        %s168 = smul.u32 32, %s10
        %p169 = scmp.lt.s32.totalorder %s168, 63
        %s170 = scalar_select %p169, %s168, 63
        %s171 = smul.addr %s170, 8
        %s172 = scalar_lea.vmem %s3, %s171
        %s173 = smul.u32 32, %s10
      $region32: #{forward.7} parent=23 // pred_fallthru
        _
    $region24: #{forward.7} parent=5 // pred_fallthru
      _
    %p174 = scmp.le.s32.totalorder 1, %s10
    %p175 = scmp.lt.s32.totalorder %s10, 3
    %p176 = pnand %p174, %p175
    %p177 = pneg %p176
    // Predicated region
    $region33: #{forward.7} parent=5 // pred_check
      _
    $region34: #{forward.7} parent=5 // pred_check_branch
      %179 = sbr.rel (%p176) target = $region36
    $region35: #{forward.7} parent=5 // pred_region
      %s180 = ssub.s32 %s10, 1
      %s181 = smul.u32 32, %s15
      %p182 = scmp.lt.s32.totalorder %s181, 63
      %s183 = scalar_select %p182, %s181, 63
      %s184 = smul.addr %s183, 2
      %s185 = smul.addr %s184, 4
      %s186 = scalar_lea.vmem %s0, %s185
      %p187 = pneg %p36
      %p188 = pneg %p33
      %p189 = pneg %p57
      %p190 = pneg %p54
      %p191 = pneg %p78
      %p192 = pneg %p75
      %s193 = smul.u32 32, %s15
      %p194 = scmp.lt.s32.totalorder %s193, 63
      %s195 = scalar_select %p194, %s193, 63
      %s196 = smul.addr %s195, 8
      %s197 = scalar_lea.vmem %s3, %s196
      %p198 = pneg %p104
      %p199 = pneg %p101
      %p200 = pneg %p130
      %p201 = pneg %p127
      %s202 = smul.u32 32, %s15
      %p203 = scmp.lt.s32.totalorder %s202, 63
      %s204 = scalar_select %p203, %s202, 63
      %s205 = smul.addr %s204, 8
      %s206 = scalar_lea.vmem %s4, %s205
      %s207 = smul.u32 32, %s15
      %p208 = scmp.lt.s32.totalorder %s207, 63
      %s209 = scalar_select %p208, %s207, 63
      %s210 = smul.addr %s209, 2
      %s211 = smul.addr %s210, 4
      %s212 = scalar_lea.vmem %s0, %s211
      %s213 = smul.u32 32, %s15
      %s214 = smul.u32 32, %s15
      %p215 = scmp.lt.s32.totalorder %s214, 63
      %s216 = scalar_select %p215, %s214, 63
      %s217 = smul.addr %s216, 8
      %s218 = scalar_lea.vmem %s3, %s217
      %s219 = smul.u32 32, %s15
      %s220 = smul.u32 32, %s15
      %p221 = scmp.lt.s32.totalorder %s220, 63
      %s222 = scalar_select %p221, %s220, 63
      %s223 = smul.addr %s222, 8
      %s224 = scalar_lea.vmem %s4, %s223
      %s225 = smul.u32 32, %s15
      %v227 = vld [vmem:[%s212] sm:$0xff]
      %v228 = vld [vmem:[%s212 + $0x8] sm:$0xff]
      %v229 = vld [vmem:[%s212 + $0x10] sm:$0xff]
      %v230 = vld [vmem:[%s212 + $0x18] sm:$0xff]
      %v231 = vld [vmem:[%s212 + $0x20] sm:$0xff]
      %v232 = vld [vmem:[%s212 + $0x28] sm:$0xff]
      %v233 = vld [vmem:[%s212 + $0x30] sm:$0xff]
      %v234 = vld [vmem:[%s212 + $0x38] sm:$0xff]
      %v235 = vld [vmem:[%s212 + $0x40] sm:$0xff]
      %v236 = vld [vmem:[%s212 + $0x48] sm:$0xff]
      %v237 = vld [vmem:[%s212 + $0x50] sm:$0xff]
      %v238 = vld [vmem:[%s212 + $0x58] sm:$0xff]
      %v239 = vld [vmem:[%s212 + $0x60] sm:$0xff]
      %v240 = vld [vmem:[%s212 + $0x68] sm:$0xff]
      %v241 = vld [vmem:[%s212 + $0x70] sm:$0xff]
      %v242 = vld [vmem:[%s212 + $0x78] sm:$0xff]
      %v243 = vld [vmem:[%s212 + $0x80] sm:$0xff]
      %v244 = vld [vmem:[%s212 + $0x88] sm:$0xff]
      %v245 = vld [vmem:[%s212 + $0x90] sm:$0xff]
      %v246 = vld [vmem:[%s212 + $0x98] sm:$0xff]
      %v247 = vld [vmem:[%s212 + $0xa0] sm:$0xff]
      %v248 = vld [vmem:[%s212 + $0xa8] sm:$0xff]
      %v249 = vld [vmem:[%s212 + $0xb0] sm:$0xff]
      %v250 = vld [vmem:[%s212 + $0xb8] sm:$0xff]
      %v251 = vld [vmem:[%s212 + $0xc0] sm:$0xff]
      %v252 = vld [vmem:[%s212 + $0xc8] sm:$0xff]
      %v253 = vld [vmem:[%s212 + $0xd0] sm:$0xff]
      %v254 = vld [vmem:[%s212 + $0xd8] sm:$0xff]
      %v255 = vld [vmem:[%s212 + $0xe0] sm:$0xff]
      %v256 = vld [vmem:[%s212 + $0xe8] sm:$0xff]
      %v257 = vld [vmem:[%s212 + $0xf0] sm:$0xff]
      %v258 = vld [vmem:[%s212 + $0xf8] sm:$0xff]
      %v259 = vld [vmem:[%s1] sm:$0xf]
      %v260 = vld [vmem:[%s1 + $0x4] sm:$0xf]
      %v261 = vld [vmem:[%s1 + $0x8] sm:$0xf]
      %v262 = vld [vmem:[%s1 + $0xc] sm:$0xf]
      %v263 = vld [vmem:[%s1 + $0x10] sm:$0xf]
      %v264 = vld [vmem:[%s1 + $0x14] sm:$0xf]
      %v265 = vld [vmem:[%s1 + $0x18] sm:$0xf]
      %v266 = vld [vmem:[%s1 + $0x1c] sm:$0xf]
      %v267 = vld [vmem:[%s1 + $0x20] sm:$0xf]
      %v268 = vld [vmem:[%s1 + $0x24] sm:$0xf]
      %v269 = vld [vmem:[%s1 + $0x28] sm:$0xf]
      %v270 = vld [vmem:[%s1 + $0x2c] sm:$0xf]
      %v271 = vld [vmem:[%s1 + $0x30] sm:$0xf]
      %v272 = vld [vmem:[%s1 + $0x34] sm:$0xf]
      %v273 = vld [vmem:[%s1 + $0x38] sm:$0xf]
      %v274 = vld [vmem:[%s1 + $0x3c] sm:$0xf]
      %v275 = vld [vmem:[%s1 + $0x40] sm:$0xf]
      %v276 = vld [vmem:[%s1 + $0x44] sm:$0xf]
      %v277 = vld [vmem:[%s1 + $0x48] sm:$0xf]
      %v278 = vld [vmem:[%s1 + $0x4c] sm:$0xf]
      %v279 = vld [vmem:[%s1 + $0x50] sm:$0xf]
      %v280 = vld [vmem:[%s1 + $0x54] sm:$0xf]
      %v281 = vld [vmem:[%s1 + $0x58] sm:$0xf]
      %v282 = vld [vmem:[%s1 + $0x5c] sm:$0xf]
      %v283 = vld [vmem:[%s1 + $0x60] sm:$0xf]
      %v284 = vld [vmem:[%s1 + $0x64] sm:$0xf]
      %v285 = vld [vmem:[%s1 + $0x68] sm:$0xf]
      %v286 = vld [vmem:[%s1 + $0x6c] sm:$0xf]
      %v287 = vld [vmem:[%s1 + $0x70] sm:$0xf]
      %v288 = vld [vmem:[%s1 + $0x74] sm:$0xf]
      %v289 = vld [vmem:[%s1 + $0x78] sm:$0xf]
      %v290 = vld [vmem:[%s1 + $0x7c] sm:$0xf]
      %v291 = vld [vmem:[%s2] sm:$0x1]
      %v293 = vlaneseq
      %v294 = vshrl.u32 %v293, 7
      %v295 = vsub.s32 0, %v294
      %v296 = vrot.slane %v291, %v295
      %v330 = vunpack.c.l.b16 %v227
      %v331 = vunpack.c.h.b16 %v227
      %v332 = vunpack.c.l.b16 %v228
      %v333 = vunpack.c.h.b16 %v228
      %v334 = vunpack.c.l.b16 %v229
      %v335 = vunpack.c.h.b16 %v229
      %v336 = vunpack.c.l.b16 %v230
      %v337 = vunpack.c.h.b16 %v230
      %v338 = vunpack.c.l.b16 %v231
      %v339 = vunpack.c.h.b16 %v231
      %v340 = vunpack.c.l.b16 %v232
      %v341 = vunpack.c.h.b16 %v232
      %v342 = vunpack.c.l.b16 %v233
      %v343 = vunpack.c.h.b16 %v233
      %v344 = vunpack.c.l.b16 %v234
      %v345 = vunpack.c.h.b16 %v234
      %v346 = vunpack.c.l.b16 %v235
      %v347 = vunpack.c.h.b16 %v235
      %v348 = vunpack.c.l.b16 %v236
      %v349 = vunpack.c.h.b16 %v236
      %v350 = vunpack.c.l.b16 %v237
      %v351 = vunpack.c.h.b16 %v237
      %v352 = vunpack.c.l.b16 %v238
      %v353 = vunpack.c.h.b16 %v238
      %v354 = vunpack.c.l.b16 %v239
      %v355 = vunpack.c.h.b16 %v239
      %v356 = vunpack.c.l.b16 %v240
      %v357 = vunpack.c.h.b16 %v240
      %v358 = vunpack.c.l.b16 %v241
      %v359 = vunpack.c.h.b16 %v241
      %v360 = vunpack.c.l.b16 %v242
      %v361 = vunpack.c.h.b16 %v242
      %v362 = vunpack.c.l.b16 %v243
      %v363 = vunpack.c.h.b16 %v243
      %v364 = vunpack.c.l.b16 %v244
      %v365 = vunpack.c.h.b16 %v244
      %v366 = vunpack.c.l.b16 %v245
      %v367 = vunpack.c.h.b16 %v245
      %v368 = vunpack.c.l.b16 %v246
      %v369 = vunpack.c.h.b16 %v246
      %v370 = vunpack.c.l.b16 %v247
      %v371 = vunpack.c.h.b16 %v247
      %v372 = vunpack.c.l.b16 %v248
      %v373 = vunpack.c.h.b16 %v248
      %v374 = vunpack.c.l.b16 %v249
      %v375 = vunpack.c.h.b16 %v249
      %v376 = vunpack.c.l.b16 %v250
      %v377 = vunpack.c.h.b16 %v250
      %v378 = vunpack.c.l.b16 %v251
      %v379 = vunpack.c.h.b16 %v251
      %v380 = vunpack.c.l.b16 %v252
      %v381 = vunpack.c.h.b16 %v252
      %v382 = vunpack.c.l.b16 %v253
      %v383 = vunpack.c.h.b16 %v253
      %v384 = vunpack.c.l.b16 %v254
      %v385 = vunpack.c.h.b16 %v254
      %v386 = vunpack.c.l.b16 %v255
      %v387 = vunpack.c.h.b16 %v255
      %v388 = vunpack.c.l.b16 %v256
      %v389 = vunpack.c.h.b16 %v256
      %v390 = vunpack.c.l.b16 %v257
      %v391 = vunpack.c.h.b16 %v257
      %v392 = vunpack.c.l.b16 %v258
      %v393 = vunpack.c.h.b16 %v258
      %v394 = vpack.c.b16 %v332, %v330
      %v395 = vpack.c.b16 %v333, %v331
      %v396 = vpack.c.b16 %v336, %v334
      %v397 = vpack.c.b16 %v337, %v335
      %v398 = vpack.c.b16 %v340, %v338
      %v399 = vpack.c.b16 %v341, %v339
      %v400 = vpack.c.b16 %v344, %v342
      %v401 = vpack.c.b16 %v345, %v343
      %v402 = vpack.c.b16 %v348, %v346
      %v403 = vpack.c.b16 %v349, %v347
      %v404 = vpack.c.b16 %v352, %v350
      %v405 = vpack.c.b16 %v353, %v351
      %v406 = vpack.c.b16 %v356, %v354
      %v407 = vpack.c.b16 %v357, %v355
      %v408 = vpack.c.b16 %v360, %v358
      %v409 = vpack.c.b16 %v361, %v359
      %v410 = vpack.c.b16 %v364, %v362
      %v411 = vpack.c.b16 %v365, %v363
      %v412 = vpack.c.b16 %v368, %v366
      %v413 = vpack.c.b16 %v369, %v367
      %v414 = vpack.c.b16 %v372, %v370
      %v415 = vpack.c.b16 %v373, %v371
      %v416 = vpack.c.b16 %v376, %v374
      %v417 = vpack.c.b16 %v377, %v375
      %v418 = vpack.c.b16 %v380, %v378
      %v419 = vpack.c.b16 %v381, %v379
      %v420 = vpack.c.b16 %v384, %v382
      %v421 = vpack.c.b16 %v385, %v383
      %v422 = vpack.c.b16 %v388, %v386
      %v423 = vpack.c.b16 %v389, %v387
      %v424 = vpack.c.b16 %v392, %v390
      %v425 = vpack.c.b16 %v393, %v391
      %v490 = vunpack.c.l.b16 %v259
      %v491 = vunpack.c.l.b16 %v260
      %v492 = vunpack.c.l.b16 %v261
      %v493 = vunpack.c.l.b16 %v262
      %v494 = vunpack.c.l.b16 %v263
      %v495 = vunpack.c.l.b16 %v264
      %v496 = vunpack.c.l.b16 %v265
      %v497 = vunpack.c.l.b16 %v266
      %v498 = vunpack.c.l.b16 %v267
      %v499 = vunpack.c.l.b16 %v268
      %v500 = vunpack.c.l.b16 %v269
      %v501 = vunpack.c.l.b16 %v270
      %v502 = vunpack.c.l.b16 %v271
      %v503 = vunpack.c.l.b16 %v272
      %v504 = vunpack.c.l.b16 %v273
      %v505 = vunpack.c.l.b16 %v274
      %v506 = vunpack.c.l.b16 %v275
      %v507 = vunpack.c.l.b16 %v276
      %v508 = vunpack.c.l.b16 %v277
      %v509 = vunpack.c.l.b16 %v278
      %v510 = vunpack.c.l.b16 %v279
      %v511 = vunpack.c.l.b16 %v280
      %v512 = vunpack.c.l.b16 %v281
      %v513 = vunpack.c.l.b16 %v282
      %v514 = vunpack.c.l.b16 %v283
      %v515 = vunpack.c.l.b16 %v284
      %v516 = vunpack.c.l.b16 %v285
      %v517 = vunpack.c.l.b16 %v286
      %v518 = vunpack.c.l.b16 %v287
      %v519 = vunpack.c.l.b16 %v288
      %v520 = vunpack.c.l.b16 %v289
      %v521 = vunpack.c.l.b16 %v290
      %v522 = vpack.c.b16 %v491, %v490
      %v523 = vpack.c.b16 %v493, %v492
      %v524 = vpack.c.b16 %v495, %v494
      %v525 = vpack.c.b16 %v497, %v496
      %v526 = vpack.c.b16 %v499, %v498
      %v527 = vpack.c.b16 %v501, %v500
      %v528 = vpack.c.b16 %v503, %v502
      %v529 = vpack.c.b16 %v505, %v504
      %v530 = vpack.c.b16 %v507, %v506
      %v531 = vpack.c.b16 %v509, %v508
      %v532 = vpack.c.b16 %v511, %v510
      %v533 = vpack.c.b16 %v513, %v512
      %v534 = vpack.c.b16 %v515, %v514
      %v535 = vpack.c.b16 %v517, %v516
      %v536 = vpack.c.b16 %v519, %v518
      %v537 = vpack.c.b16 %v521, %v520
      %554 = vmatprep.subr.bf16.mxu0 0
      %555 = vmatpush1.bf16.msra.mxu0 %v529
      %556 = vmatprep.subr.bf16.mxu0 0
      %557 = vmatpush1.bf16.msra.mxu0 %v528
      %558 = vmatprep.subr.bf16.mxu0 0
      %559 = vmatpush1.bf16.msra.mxu0 %v527
      %560 = vmatprep.subr.bf16.mxu0 0
      %561 = vmatpush1.bf16.msra.mxu0 %v526
      %562 = vmatprep.subr.bf16.mxu0 0
      %563 = vmatpush1.bf16.msra.mxu0 %v525
      %564 = vmatprep.subr.bf16.mxu0 0
      %565 = vmatpush1.bf16.msra.mxu0 %v524
      %566 = vmatprep.subr.bf16.mxu0 0
      %567 = vmatpush1.bf16.msra.mxu0 %v523
      %568 = vmatprep.subr.bf16.mxu0 0
      %569 = vmatpush1.bf16.msra.mxu0 %v522
      %570 = vmatprep.subr.bf16.mxu0 0
      %571 = vmatpush2.bf16.msra.mxu0 %v537
      %572 = vmatprep.subr.bf16.mxu0 0
      %573 = vmatpush2.bf16.msra.mxu0 %v536
      %574 = vmatprep.subr.bf16.mxu0 0
      %575 = vmatpush2.bf16.msra.mxu0 %v535
      %576 = vmatprep.subr.bf16.mxu0 0
      %577 = vmatpush2.bf16.msra.mxu0 %v534
      %578 = vmatprep.subr.bf16.mxu0 0
      %579 = vmatpush2.bf16.msra.mxu0 %v533
      %580 = vmatprep.subr.bf16.mxu0 0
      %581 = vmatpush2.bf16.msra.mxu0 %v532
      %582 = vmatprep.subr.bf16.mxu0 0
      %583 = vmatpush2.bf16.msra.mxu0 %v531
      %584 = vmatprep.subr.bf16.mxu0 0
      %585 = vmatpush2.bf16.msra.mxu0 %v530
      %586 = vmatprep.mubr.bf16.mxu0 %v395
      %587 = vmatmul.mubr.bf16.gmra.mxu0 %v394
      %v588 = vpop.f32.mrf.mxu0
      %v589 = vadd.f32 %v296, %v588
      %v590 = vpop.f32.mrf.mxu0
      %v591 = vpop.f32.mrf.mxu0
      %v592 = vadd.f32 %v296, %v591
      %v593 = vpop.f32.mrf.mxu0
      %594 = vmatprep.mubr.bf16.mxu0 %v397
      %595 = vmatmul.mubr.bf16.gmra.mxu0 %v396
      %v596 = vpop.f32.mrf.mxu0
      %v597 = vadd.f32 %v296, %v596
      %v598 = vpop.f32.mrf.mxu0
      %v599 = vpop.f32.mrf.mxu0
      %v600 = vadd.f32 %v296, %v599
      %v601 = vpop.f32.mrf.mxu0
      %602 = vmatprep.mubr.bf16.mxu0 %v399
      %603 = vmatmul.mubr.bf16.gmra.mxu0 %v398
      %v604 = vpop.f32.mrf.mxu0
      %v605 = vadd.f32 %v296, %v604
      %v606 = vpop.f32.mrf.mxu0
      %v607 = vpop.f32.mrf.mxu0
      %v608 = vadd.f32 %v296, %v607
      %v609 = vpop.f32.mrf.mxu0
      %610 = vmatprep.mubr.bf16.mxu0 %v401
      %611 = vmatmul.mubr.bf16.gmra.mxu0 %v400
      %v612 = vpop.f32.mrf.mxu0
      %v613 = vadd.f32 %v296, %v612
      %v614 = vpop.f32.mrf.mxu0
      %v615 = vpop.f32.mrf.mxu0
      %v616 = vadd.f32 %v296, %v615
      %v617 = vpop.f32.mrf.mxu0
      %618 = vmatprep.mubr.bf16.mxu0 %v403
      %619 = vmatmul.mubr.bf16.gmra.mxu0 %v402
      %v620 = vpop.f32.mrf.mxu0
      %v621 = vadd.f32 %v296, %v620
      %v622 = vpop.f32.mrf.mxu0
      %v623 = vpop.f32.mrf.mxu0
      %v624 = vadd.f32 %v296, %v623
      %v625 = vpop.f32.mrf.mxu0
      %626 = vmatprep.mubr.bf16.mxu0 %v405
      %627 = vmatmul.mubr.bf16.gmra.mxu0 %v404
      %v628 = vpop.f32.mrf.mxu0
      %v629 = vadd.f32 %v296, %v628
      %v630 = vpop.f32.mrf.mxu0
      %v631 = vpop.f32.mrf.mxu0
      %v632 = vadd.f32 %v296, %v631
      %v633 = vpop.f32.mrf.mxu0
      %634 = vmatprep.mubr.bf16.mxu0 %v407
      %635 = vmatmul.mubr.bf16.gmra.mxu0 %v406
      %v636 = vpop.f32.mrf.mxu0
      %v637 = vadd.f32 %v296, %v636
      %v638 = vpop.f32.mrf.mxu0
      %v639 = vpop.f32.mrf.mxu0
      %v640 = vadd.f32 %v296, %v639
      %v641 = vpop.f32.mrf.mxu0
      %642 = vmatprep.mubr.bf16.mxu0 %v409
      %643 = vmatmul.mubr.bf16.gmra.mxu0 %v408
      %v644 = vpop.f32.mrf.mxu0
      %v645 = vadd.f32 %v296, %v644
      %v646 = vpop.f32.mrf.mxu0
      %v647 = vpop.f32.mrf.mxu0
      %v648 = vadd.f32 %v296, %v647
      %v649 = vpop.f32.mrf.mxu0
      %650 = vmatprep.mubr.bf16.mxu0 %v411
      %651 = vmatmul.mubr.bf16.gmra.mxu0 %v410
      %v652 = vpop.f32.mrf.mxu0
      %v653 = vadd.f32 %v296, %v652
      %v654 = vpop.f32.mrf.mxu0
      %v655 = vpop.f32.mrf.mxu0
      %v656 = vadd.f32 %v296, %v655
      %v657 = vpop.f32.mrf.mxu0
      %658 = vmatprep.mubr.bf16.mxu0 %v413
      %659 = vmatmul.mubr.bf16.gmra.mxu0 %v412
      %v660 = vpop.f32.mrf.mxu0
      %v661 = vadd.f32 %v296, %v660
      %v662 = vpop.f32.mrf.mxu0
      %v663 = vpop.f32.mrf.mxu0
      %v664 = vadd.f32 %v296, %v663
      %v665 = vpop.f32.mrf.mxu0
      %666 = vmatprep.mubr.bf16.mxu0 %v415
      %667 = vmatmul.mubr.bf16.gmra.mxu0 %v414
      %v668 = vpop.f32.mrf.mxu0
      %v669 = vadd.f32 %v296, %v668
      %v670 = vpop.f32.mrf.mxu0
      %v671 = vpop.f32.mrf.mxu0
      %v672 = vadd.f32 %v296, %v671
      %v673 = vpop.f32.mrf.mxu0
      %674 = vmatprep.mubr.bf16.mxu0 %v417
      %675 = vmatmul.mubr.bf16.gmra.mxu0 %v416
      %v676 = vpop.f32.mrf.mxu0
      %v677 = vadd.f32 %v296, %v676
      %v678 = vpop.f32.mrf.mxu0
      %v679 = vpop.f32.mrf.mxu0
      %v680 = vadd.f32 %v296, %v679
      %v681 = vpop.f32.mrf.mxu0
      %682 = vmatprep.mubr.bf16.mxu0 %v419
      %683 = vmatmul.mubr.bf16.gmra.mxu0 %v418
      %v684 = vpop.f32.mrf.mxu0
      %v685 = vadd.f32 %v296, %v684
      %v686 = vpop.f32.mrf.mxu0
      %v687 = vpop.f32.mrf.mxu0
      %v688 = vadd.f32 %v296, %v687
      %v689 = vpop.f32.mrf.mxu0
      %690 = vmatprep.mubr.bf16.mxu0 %v421
      %691 = vmatmul.mubr.bf16.gmra.mxu0 %v420
      %v692 = vpop.f32.mrf.mxu0
      %v693 = vadd.f32 %v296, %v692
      %v694 = vpop.f32.mrf.mxu0
      %v695 = vpop.f32.mrf.mxu0
      %v696 = vadd.f32 %v296, %v695
      %v697 = vpop.f32.mrf.mxu0
      %698 = vmatprep.mubr.bf16.mxu0 %v423
      %699 = vmatmul.mubr.bf16.gmra.mxu0 %v422
      %v700 = vpop.f32.mrf.mxu0
      %v701 = vadd.f32 %v296, %v700
      %v702 = vpop.f32.mrf.mxu0
      %v703 = vpop.f32.mrf.mxu0
      %v704 = vadd.f32 %v296, %v703
      %v705 = vpop.f32.mrf.mxu0
      %706 = vmatprep.mubr.bf16.mxu0 %v425
      %707 = vmatmul.mubr.bf16.gmra.mxu0 %v424
      %v708 = vpop.f32.mrf.mxu0
      %v709 = vadd.f32 %v296, %v708
      %v710 = vpop.f32.mrf.mxu0
      %v711 = vpop.f32.mrf.mxu0
      %v712 = vadd.f32 %v296, %v711
      %v713 = vpop.f32.mrf.mxu0
      %714 = vdwg.mxu0
      %v715 = vld [vmem:[%s218] sm:$0xff]
      %v716 = vld [vmem:[%s218 + $0x8] sm:$0xff]
      %v717 = vld [vmem:[%s218 + $0x10] sm:$0xff]
      %v718 = vld [vmem:[%s218 + $0x18] sm:$0xff]
      %v719 = vld [vmem:[%s218 + $0x20] sm:$0xff]
      %v720 = vld [vmem:[%s218 + $0x28] sm:$0xff]
      %v721 = vld [vmem:[%s218 + $0x30] sm:$0xff]
      %v722 = vld [vmem:[%s218 + $0x38] sm:$0xff]
      %v723 = vld [vmem:[%s218 + $0x40] sm:$0xff]
      %v724 = vld [vmem:[%s218 + $0x48] sm:$0xff]
      %v725 = vld [vmem:[%s218 + $0x50] sm:$0xff]
      %v726 = vld [vmem:[%s218 + $0x58] sm:$0xff]
      %v727 = vld [vmem:[%s218 + $0x60] sm:$0xff]
      %v728 = vld [vmem:[%s218 + $0x68] sm:$0xff]
      %v729 = vld [vmem:[%s218 + $0x70] sm:$0xff]
      %v730 = vld [vmem:[%s218 + $0x78] sm:$0xff]
      %v731 = vld [vmem:[%s218 + $0x80] sm:$0xff]
      %v732 = vld [vmem:[%s218 + $0x88] sm:$0xff]
      %v733 = vld [vmem:[%s218 + $0x90] sm:$0xff]
      %v734 = vld [vmem:[%s218 + $0x98] sm:$0xff]
      %v735 = vld [vmem:[%s218 + $0xa0] sm:$0xff]
      %v736 = vld [vmem:[%s218 + $0xa8] sm:$0xff]
      %v737 = vld [vmem:[%s218 + $0xb0] sm:$0xff]
      %v738 = vld [vmem:[%s218 + $0xb8] sm:$0xff]
      %v739 = vld [vmem:[%s218 + $0xc0] sm:$0xff]
      %v740 = vld [vmem:[%s218 + $0xc8] sm:$0xff]
      %v741 = vld [vmem:[%s218 + $0xd0] sm:$0xff]
      %v742 = vld [vmem:[%s218 + $0xd8] sm:$0xff]
      %v743 = vld [vmem:[%s218 + $0xe0] sm:$0xff]
      %v744 = vld [vmem:[%s218 + $0xe8] sm:$0xff]
      %v745 = vld [vmem:[%s218 + $0xf0] sm:$0xff]
      %v746 = vld [vmem:[%s218 + $0xf8] sm:$0xff]
      %v747 = vadd.f32 %v589, %v715
      %v748 = vadd.f32 %v592, %v716
      %v749 = vadd.f32 %v597, %v717
      %v750 = vadd.f32 %v600, %v718
      %v751 = vadd.f32 %v605, %v719
      %v752 = vadd.f32 %v608, %v720
      %v753 = vadd.f32 %v613, %v721
      %v754 = vadd.f32 %v616, %v722
      %v755 = vadd.f32 %v621, %v723
      %v756 = vadd.f32 %v624, %v724
      %v757 = vadd.f32 %v629, %v725
      %v758 = vadd.f32 %v632, %v726
      %v759 = vadd.f32 %v637, %v727
      %v760 = vadd.f32 %v640, %v728
      %v761 = vadd.f32 %v645, %v729
      %v762 = vadd.f32 %v648, %v730
      %v763 = vadd.f32 %v653, %v731
      %v764 = vadd.f32 %v656, %v732
      %v765 = vadd.f32 %v661, %v733
      %v766 = vadd.f32 %v664, %v734
      %v767 = vadd.f32 %v669, %v735
      %v768 = vadd.f32 %v672, %v736
      %v769 = vadd.f32 %v677, %v737
      %v770 = vadd.f32 %v680, %v738
      %v771 = vadd.f32 %v685, %v739
      %v772 = vadd.f32 %v688, %v740
      %v773 = vadd.f32 %v693, %v741
      %v774 = vadd.f32 %v696, %v742
      %v775 = vadd.f32 %v701, %v743
      %v776 = vadd.f32 %v704, %v744
      %v777 = vadd.f32 %v709, %v745
      %v778 = vadd.f32 %v712, %v746
      %v779 = vmax.f32 %v747, 0.0
      %v780 = vmax.f32 %v748, 0.0
      %v781 = vmax.f32 %v749, 0.0
      %v782 = vmax.f32 %v750, 0.0
      %v783 = vmax.f32 %v751, 0.0
      %v784 = vmax.f32 %v752, 0.0
      %v785 = vmax.f32 %v753, 0.0
      %v786 = vmax.f32 %v754, 0.0
      %v787 = vmax.f32 %v755, 0.0
      %v788 = vmax.f32 %v756, 0.0
      %v789 = vmax.f32 %v757, 0.0
      %v790 = vmax.f32 %v758, 0.0
      %v791 = vmax.f32 %v759, 0.0
      %v792 = vmax.f32 %v760, 0.0
      %v793 = vmax.f32 %v761, 0.0
      %v794 = vmax.f32 %v762, 0.0
      %v795 = vmax.f32 %v763, 0.0
      %v796 = vmax.f32 %v764, 0.0
      %v797 = vmax.f32 %v765, 0.0
      %v798 = vmax.f32 %v766, 0.0
      %v799 = vmax.f32 %v767, 0.0
      %v800 = vmax.f32 %v768, 0.0
      %v801 = vmax.f32 %v769, 0.0
      %v802 = vmax.f32 %v770, 0.0
      %v803 = vmax.f32 %v771, 0.0
      %v804 = vmax.f32 %v772, 0.0
      %v805 = vmax.f32 %v773, 0.0
      %v806 = vmax.f32 %v774, 0.0
      %v807 = vmax.f32 %v775, 0.0
      %v808 = vmax.f32 %v776, 0.0
      %v809 = vmax.f32 %v777, 0.0
      %v810 = vmax.f32 %v778, 0.0
      %811 = vst [vmem:[%s224] sm:$0xff] %v779
      %812 = vst [vmem:[%s224 + $0x8] sm:$0xff] %v780
      %813 = vst [vmem:[%s224 + $0x10] sm:$0xff] %v781
      %814 = vst [vmem:[%s224 + $0x18] sm:$0xff] %v782
      %815 = vst [vmem:[%s224 + $0x20] sm:$0xff] %v783
      %816 = vst [vmem:[%s224 + $0x28] sm:$0xff] %v784
      %817 = vst [vmem:[%s224 + $0x30] sm:$0xff] %v785
      %818 = vst [vmem:[%s224 + $0x38] sm:$0xff] %v786
      %819 = vst [vmem:[%s224 + $0x40] sm:$0xff] %v787
      %820 = vst [vmem:[%s224 + $0x48] sm:$0xff] %v788
      %821 = vst [vmem:[%s224 + $0x50] sm:$0xff] %v789
      %822 = vst [vmem:[%s224 + $0x58] sm:$0xff] %v790
      %823 = vst [vmem:[%s224 + $0x60] sm:$0xff] %v791
      %824 = vst [vmem:[%s224 + $0x68] sm:$0xff] %v792
      %825 = vst [vmem:[%s224 + $0x70] sm:$0xff] %v793
      %826 = vst [vmem:[%s224 + $0x78] sm:$0xff] %v794
      %827 = vst [vmem:[%s224 + $0x80] sm:$0xff] %v795
      %828 = vst [vmem:[%s224 + $0x88] sm:$0xff] %v796
      %829 = vst [vmem:[%s224 + $0x90] sm:$0xff] %v797
      %830 = vst [vmem:[%s224 + $0x98] sm:$0xff] %v798
      %831 = vst [vmem:[%s224 + $0xa0] sm:$0xff] %v799
      %832 = vst [vmem:[%s224 + $0xa8] sm:$0xff] %v800
      %833 = vst [vmem:[%s224 + $0xb0] sm:$0xff] %v801
      %834 = vst [vmem:[%s224 + $0xb8] sm:$0xff] %v802
      %835 = vst [vmem:[%s224 + $0xc0] sm:$0xff] %v803
      %836 = vst [vmem:[%s224 + $0xc8] sm:$0xff] %v804
      %837 = vst [vmem:[%s224 + $0xd0] sm:$0xff] %v805
      %838 = vst [vmem:[%s224 + $0xd8] sm:$0xff] %v806
      %839 = vst [vmem:[%s224 + $0xe0] sm:$0xff] %v807
      %840 = vst [vmem:[%s224 + $0xe8] sm:$0xff] %v808
      %841 = vst [vmem:[%s224 + $0xf0] sm:$0xff] %v809
      %842 = vst [vmem:[%s224 + $0xf8] sm:$0xff] %v810
      %s843 = smul.u32 32, %s15
      %p844 = scmp.lt.s32.totalorder %s843, 63
      %s845 = scalar_select %p844, %s843, 63
      %s846 = smul.addr %s845, 8
      %s847 = scalar_lea.vmem %s4, %s846
      // Predicated region
      $region37: #{forward.7} parent=35 // pred_check
        %p848 = pneg %p127
      $region38: #{forward.7} parent=35 // pred_check_branch
        %850 = sbr.rel (%p848) target = $region40
      $region39: #{forward.7} parent=35 // pred_region
        %s851 = smul.u32 32, %s15
      $region40: #{forward.7} parent=35 // pred_fallthru
        _
    $region36: #{forward.7} parent=5 // pred_fallthru
      _
    %p852 = scmp.le.s32.totalorder 2, %s10
    // Predicated region
    $region41: #{forward.7} parent=5 // pred_check
      %p853 = pneg %p852
    $region42: #{forward.7} parent=5 // pred_check_branch
      %855 = sbr.rel (%p853) target = $region44
    $region43: #{forward.7} parent=5 // pred_region
      %s856 = ssub.s32 %s10, 2
      // Predicated region
      $region45: #{forward.7} parent=43 // pred_check
        %p857 = pneg %p133
      $region46: #{forward.7} parent=43 // pred_check_branch
        %859 = sbr.rel (%p857) target = $region48
      $region47: #{forward.7} parent=43 // pred_region
        %s860 = smul.u32 32, %s16
        %p861 = scmp.lt.s32.totalorder %s860, 63
        %s862 = scalar_select %p861, %s860, 63
        %s863 = smul.addr %s862, 8
        %s864 = scalar_lea.vmem %s4, %s863
      $region48: #{forward.7} parent=43 // pred_fallthru
        _
    $region44: #{forward.7} parent=5 // pred_fallthru
      _
  $region6: #{forward.7} parent=0 // loop_footer
    %s14 = sadd.s32 1, %s10
  $region7: #{forward.7} parent=0 // loop_footer_branch
    %9 = sbr.rel target = $region3
  $region8: #{forward.7} parent=0 // loop_exit
    _

// kernel: forward.8
$region0: #{forward.8}
  #allocation0 [shape = 'u32[]', space=smem, size = 0x4, offset = 0x4, fixed_abs, tag = 'smem constant byte address 0x4 - core index']
  #allocation1 [shape = 'u32[144,128]{1,0:T(1,128)}', space=vmem, size = 0x12000, scoped, tag = 'internal scratch']
  %s0 = inlined_call_operand.vmem [shape: bf16[512,256], index: 0, kind: input, shape index: {}]
  %s1 = inlined_call_operand.vmem [shape: bf16[256,128], index: 1, kind: input, shape index: {}]
  %s2 = inlined_call_operand.vmem [shape: f32[1,128], index: 2, kind: input, shape index: {}]
  %s3 = inlined_call_operand.vmem [shape: bf16[512,128], index: 3, kind: output, shape index: {}]
  %s4 = sld [smem:[#allocation0]]
  $region45: #{forward.8} parent=0
    _
  %s6 = ssub.s32 1, %s4
  %s7 = scalar_select 0, %s6, %s4
  loop: start=0, step=1, limit=4
  $region2: #{forward.8} parent=0 // loop_pre_header
    _
  $region3: #{forward.8} parent=0 // loop_header
    %s9 = sphi 0, %s13
    %p10 = scmp.ge.s32.totalorder %s9, 4
    %s19 = sphi 0, %s21
    %s22 = sphi 0, %s19
    %s23 = sphi 0, %s22
    %s39 = sphi 0, %s23
    %s43 = sphi 0, %s43
    %s45 = sphi 0, %s43
    %s46 = sphi 0, %s45
    %s60 = sphi 0, %s46
    %s64 = sphi 0, %s64
    %s66 = sphi 0, %s64
    %s67 = sphi 0, %s66
    %s81 = sphi 0, %s67
    %s87 = sphi 0, %s89
    %s90 = sphi 0, %s87
    %s91 = sphi 0, %s90
    %s107 = sphi 0, %s91
  $region4: #{forward.8} parent=0 // loop_header_branch
    %12 = sbr.rel (%p10) target = $region8
  $region5: #{forward.8} parent=0 // loop_body
    %s14 = ssub.s32 %s9, 1
    %s15 = ssub.s32 %s9, 2
    %s16 = sadd.s32 %s9, 1
    %s17 = ssub.s32 %s9, %s16
    %p18 = scmp.eq.s32.totalorder %s17, 0
    %s20 = sadd.s32 %s19, 1
    %s21 = scalar_select %p18, %s19, %s20
    %p24 = pneg %p18
    %p25 = scmp.eq.s32.totalorder %s9, 1
    %p26 = por %p24, %p25
    %p27 = scmp.ne.s32.totalorder %s19, %s22
    %p28 = scmp.eq.s32.totalorder %s9, 0
    %p29 = por %p27, %p28
    %p30 = scmp.ne.s32.totalorder %s19, %s22
    %p31 = scmp.eq.s32.totalorder %s14, 1
    %p32 = por %p30, %p31
    %p33 = scmp.ne.s32.totalorder %s22, %s23
    %p34 = scmp.eq.s32.totalorder %s14, 0
    %p35 = por %p33, %p34
    %p36 = scmp.ne.s32.totalorder %s22, %s23
    %p37 = scmp.eq.s32.totalorder %s15, 1
    %p38 = por %p36, %p37
    %p40 = scmp.ne.s32.totalorder %s23, %s39
    %p41 = scmp.eq.s32.totalorder %s15, 0
    %p42 = por %p40, %p41
    %s44 = sadd.s32 %s43, 1
    %p47 = scmp.eq.s32.totalorder %s9, 1
    %p48 = scmp.ne.s32.totalorder %s43, %s45
    %p49 = scmp.eq.s32.totalorder %s9, 0
    %p50 = por %p48, %p49
    %p51 = scmp.ne.s32.totalorder %s43, %s45
    %p52 = scmp.eq.s32.totalorder %s14, 1
    %p53 = por %p51, %p52
    %p54 = scmp.ne.s32.totalorder %s45, %s46
    %p55 = scmp.eq.s32.totalorder %s14, 0
    %p56 = por %p54, %p55
    %p57 = scmp.ne.s32.totalorder %s45, %s46
    %p58 = scmp.eq.s32.totalorder %s15, 1
    %p59 = por %p57, %p58
    %p61 = scmp.ne.s32.totalorder %s46, %s60
    %p62 = scmp.eq.s32.totalorder %s15, 0
    %p63 = por %p61, %p62
    %s65 = sadd.s32 %s64, 1
    %p68 = scmp.eq.s32.totalorder %s9, 1
    %p69 = scmp.ne.s32.totalorder %s64, %s66
    %p70 = scmp.eq.s32.totalorder %s9, 0
    %p71 = por %p69, %p70
    %p72 = scmp.ne.s32.totalorder %s64, %s66
    %p73 = scmp.eq.s32.totalorder %s14, 1
    %p74 = por %p72, %p73
    %p75 = scmp.ne.s32.totalorder %s66, %s67
    %p76 = scmp.eq.s32.totalorder %s14, 0
    %p77 = por %p75, %p76
    %p78 = scmp.ne.s32.totalorder %s66, %s67
    %p79 = scmp.eq.s32.totalorder %s15, 1
    %p80 = por %p78, %p79
    %p82 = scmp.ne.s32.totalorder %s67, %s81
    %p83 = scmp.eq.s32.totalorder %s15, 0
    %p84 = por %p82, %p83
    %s85 = ssub.s32 %s9, %s16
    %p86 = scmp.eq.s32.totalorder %s85, 0
    %s88 = sadd.s32 %s87, 1
    %s89 = scalar_select %p86, %s87, %s88
    %p92 = pneg %p86
    %p93 = scmp.eq.s32.totalorder %s9, 1
    %p94 = por %p92, %p93
    %p95 = scmp.ne.s32.totalorder %s87, %s90
    %p96 = scmp.eq.s32.totalorder %s9, 0
    %p97 = por %p95, %p96
    %p98 = scmp.ne.s32.totalorder %s87, %s90
    %p99 = scmp.eq.s32.totalorder %s14, 1
    %p100 = por %p98, %p99
    %p101 = scmp.ne.s32.totalorder %s90, %s91
    %p102 = scmp.eq.s32.totalorder %s14, 0
    %p103 = por %p101, %p102
    %p104 = scmp.ne.s32.totalorder %s90, %s91
    %p105 = scmp.eq.s32.totalorder %s15, 1
    %p106 = por %p104, %p105
    %p108 = scmp.ne.s32.totalorder %s91, %s107
    %p109 = scmp.eq.s32.totalorder %s15, 0
    %p110 = por %p108, %p109
    %p111 = scmp.le.s32.totalorder 1, %s9
    %p112 = scmp.lt.s32.totalorder %s9, 3
    %p113 = pnand %p111, %p112
    %p114 = pneg %p113
    // Predicated region
    $region9: #{forward.8} parent=5 // pred_check
      _
    $region10: #{forward.8} parent=5 // pred_check_branch
      %116 = sbr.rel (%p113) target = $region12
    $region11: #{forward.8} parent=5 // pred_region
      %s117 = ssub.s32 %s9, 1
      // Predicated region
      $region13: #{forward.8} parent=11 // pred_check
        %p118 = pneg %p56
      $region14: #{forward.8} parent=11 // pred_check_branch
        %120 = sbr.rel (%p118) target = $region16
      $region15: #{forward.8} parent=11 // pred_region
        _
      $region16: #{forward.8} parent=11 // pred_fallthru
        _
      // Predicated region
      $region17: #{forward.8} parent=11 // pred_check
        %p121 = pneg %p77
      $region18: #{forward.8} parent=11 // pred_check_branch
        %123 = sbr.rel (%p121) target = $region20
      $region19: #{forward.8} parent=11 // pred_region
        _
      $region20: #{forward.8} parent=11 // pred_fallthru
        _
    $region12: #{forward.8} parent=5 // pred_fallthru
      _
    %p124 = scmp.lt.s32.totalorder %s9, 2
    // Predicated region
    $region21: #{forward.8} parent=5 // pred_check
      %p125 = pneg %p124
    $region22: #{forward.8} parent=5 // pred_check_branch
      %127 = sbr.rel (%p125) target = $region24
    $region23: #{forward.8} parent=5 // pred_region
      // Predicated region
      $region25: #{forward.8} parent=23 // pred_check
        %p128 = pneg %p29
      $region26: #{forward.8} parent=23 // pred_check_branch
        %130 = sbr.rel (%p128) target = $region28
      $region27: #{forward.8} parent=23 // pred_region
        %s131 = smul.u32 32, %s9
        %p132 = scmp.lt.s32.totalorder %s131, 63
        %s133 = scalar_select %p132, %s131, 63
        %s134 = smul.addr %s133, 2
        %s135 = smul.addr %s134, 4
        %s136 = scalar_lea.vmem %s0, %s135
        %s137 = smul.u32 32, %s9
      $region28: #{forward.8} parent=23 // pred_fallthru
        _
    $region24: #{forward.8} parent=5 // pred_fallthru
      _
    %p138 = scmp.le.s32.totalorder 1, %s9
    %p139 = scmp.lt.s32.totalorder %s9, 3
    %p140 = pnand %p138, %p139
    %p141 = pneg %p140
    // Predicated region
    $region29: #{forward.8} parent=5 // pred_check
      _
    $region30: #{forward.8} parent=5 // pred_check_branch
      %143 = sbr.rel (%p140) target = $region32
    $region31: #{forward.8} parent=5 // pred_region
      %s144 = ssub.s32 %s9, 1
      %s145 = smul.u32 32, %s14
      %p146 = scmp.lt.s32.totalorder %s145, 63
      %s147 = scalar_select %p146, %s145, 63
      %s148 = smul.addr %s147, 2
      %s149 = smul.addr %s148, 4
      %s150 = scalar_lea.vmem %s0, %s149
      %p151 = pneg %p35
      %p152 = pneg %p32
      %p153 = pneg %p56
      %p154 = pneg %p53
      %p155 = pneg %p77
      %p156 = pneg %p74
      %p157 = pneg %p103
      %p158 = pneg %p100
      %s159 = smul.u32 32, %s14
      %p160 = scmp.lt.s32.totalorder %s159, 63
      %s161 = scalar_select %p160, %s159, 63
      %s162 = smul.addr %s161, 4
      %s163 = scalar_lea.vmem %s3, %s162
      %s164 = smul.u32 32, %s14
      %p165 = scmp.lt.s32.totalorder %s164, 63
      %s166 = scalar_select %p165, %s164, 63
      %s167 = smul.addr %s166, 2
      %s168 = smul.addr %s167, 4
      %s169 = scalar_lea.vmem %s0, %s168
      %s170 = smul.u32 32, %s14
      %s171 = smul.u32 32, %s14
      %p172 = scmp.lt.s32.totalorder %s171, 63
      %s173 = scalar_select %p172, %s171, 63
      %s174 = smul.addr %s173, 4
      %s175 = scalar_lea.vmem %s3, %s174
      %s176 = smul.u32 32, %s14
      %v178 = vld [vmem:[%s169] sm:$0xff]
      %v179 = vld [vmem:[%s169 + $0x8] sm:$0xff]
      %v180 = vld [vmem:[%s169 + $0x10] sm:$0xff]
      %v181 = vld [vmem:[%s169 + $0x18] sm:$0xff]
      %v182 = vld [vmem:[%s169 + $0x20] sm:$0xff]
      %v183 = vld [vmem:[%s169 + $0x28] sm:$0xff]
      %v184 = vld [vmem:[%s169 + $0x30] sm:$0xff]
      %v185 = vld [vmem:[%s169 + $0x38] sm:$0xff]
      %v186 = vld [vmem:[%s169 + $0x40] sm:$0xff]
      %v187 = vld [vmem:[%s169 + $0x48] sm:$0xff]
      %v188 = vld [vmem:[%s169 + $0x50] sm:$0xff]
      %v189 = vld [vmem:[%s169 + $0x58] sm:$0xff]
      %v190 = vld [vmem:[%s169 + $0x60] sm:$0xff]
      %v191 = vld [vmem:[%s169 + $0x68] sm:$0xff]
      %v192 = vld [vmem:[%s169 + $0x70] sm:$0xff]
      %v193 = vld [vmem:[%s169 + $0x78] sm:$0xff]
      %v194 = vld [vmem:[%s169 + $0x80] sm:$0xff]
      %v195 = vld [vmem:[%s169 + $0x88] sm:$0xff]
      %v196 = vld [vmem:[%s169 + $0x90] sm:$0xff]
      %v197 = vld [vmem:[%s169 + $0x98] sm:$0xff]
      %v198 = vld [vmem:[%s169 + $0xa0] sm:$0xff]
      %v199 = vld [vmem:[%s169 + $0xa8] sm:$0xff]
      %v200 = vld [vmem:[%s169 + $0xb0] sm:$0xff]
      %v201 = vld [vmem:[%s169 + $0xb8] sm:$0xff]
      %v202 = vld [vmem:[%s169 + $0xc0] sm:$0xff]
      %v203 = vld [vmem:[%s169 + $0xc8] sm:$0xff]
      %v204 = vld [vmem:[%s169 + $0xd0] sm:$0xff]
      %v205 = vld [vmem:[%s169 + $0xd8] sm:$0xff]
      %v206 = vld [vmem:[%s169 + $0xe0] sm:$0xff]
      %v207 = vld [vmem:[%s169 + $0xe8] sm:$0xff]
      %v208 = vld [vmem:[%s169 + $0xf0] sm:$0xff]
      %v209 = vld [vmem:[%s169 + $0xf8] sm:$0xff]
      %v210 = vld [vmem:[%s1] sm:$0xf]
      %v211 = vld [vmem:[%s1 + $0x4] sm:$0xf]
      %v212 = vld [vmem:[%s1 + $0x8] sm:$0xf]
      %v213 = vld [vmem:[%s1 + $0xc] sm:$0xf]
      %v214 = vld [vmem:[%s1 + $0x10] sm:$0xf]
      %v215 = vld [vmem:[%s1 + $0x14] sm:$0xf]
      %v216 = vld [vmem:[%s1 + $0x18] sm:$0xf]
      %v217 = vld [vmem:[%s1 + $0x1c] sm:$0xf]
      %v218 = vld [vmem:[%s1 + $0x20] sm:$0xf]
      %v219 = vld [vmem:[%s1 + $0x24] sm:$0xf]
      %v220 = vld [vmem:[%s1 + $0x28] sm:$0xf]
      %v221 = vld [vmem:[%s1 + $0x2c] sm:$0xf]
      %v222 = vld [vmem:[%s1 + $0x30] sm:$0xf]
      %v223 = vld [vmem:[%s1 + $0x34] sm:$0xf]
      %v224 = vld [vmem:[%s1 + $0x38] sm:$0xf]
      %v225 = vld [vmem:[%s1 + $0x3c] sm:$0xf]
      %v226 = vld [vmem:[%s1 + $0x40] sm:$0xf]
      %v227 = vld [vmem:[%s1 + $0x44] sm:$0xf]
      %v228 = vld [vmem:[%s1 + $0x48] sm:$0xf]
      %v229 = vld [vmem:[%s1 + $0x4c] sm:$0xf]
      %v230 = vld [vmem:[%s1 + $0x50] sm:$0xf]
      %v231 = vld [vmem:[%s1 + $0x54] sm:$0xf]
      %v232 = vld [vmem:[%s1 + $0x58] sm:$0xf]
      %v233 = vld [vmem:[%s1 + $0x5c] sm:$0xf]
      %v234 = vld [vmem:[%s1 + $0x60] sm:$0xf]
      %v235 = vld [vmem:[%s1 + $0x64] sm:$0xf]
      %v236 = vld [vmem:[%s1 + $0x68] sm:$0xf]
      %v237 = vld [vmem:[%s1 + $0x6c] sm:$0xf]
      %v238 = vld [vmem:[%s1 + $0x70] sm:$0xf]
      %v239 = vld [vmem:[%s1 + $0x74] sm:$0xf]
      %v240 = vld [vmem:[%s1 + $0x78] sm:$0xf]
      %v241 = vld [vmem:[%s1 + $0x7c] sm:$0xf]
      %v242 = vld [vmem:[%s2] sm:$0x1]
      %v244 = vlaneseq
      %v245 = vshrl.u32 %v244, 7
      %v246 = vsub.s32 0, %v245
      %v247 = vrot.slane %v242, %v246
      %v281 = vunpack.c.l.b16 %v178
      %v282 = vunpack.c.h.b16 %v178
      %v283 = vunpack.c.l.b16 %v179
      %v284 = vunpack.c.h.b16 %v179
      %v285 = vunpack.c.l.b16 %v180
      %v286 = vunpack.c.h.b16 %v180
      %v287 = vunpack.c.l.b16 %v181
      %v288 = vunpack.c.h.b16 %v181
      %v289 = vunpack.c.l.b16 %v182
      %v290 = vunpack.c.h.b16 %v182
      %v291 = vunpack.c.l.b16 %v183
      %v292 = vunpack.c.h.b16 %v183
      %v293 = vunpack.c.l.b16 %v184
      %v294 = vunpack.c.h.b16 %v184
      %v295 = vunpack.c.l.b16 %v185
      %v296 = vunpack.c.h.b16 %v185
      %v297 = vunpack.c.l.b16 %v186
      %v298 = vunpack.c.h.b16 %v186
      %v299 = vunpack.c.l.b16 %v187
      %v300 = vunpack.c.h.b16 %v187
      %v301 = vunpack.c.l.b16 %v188
      %v302 = vunpack.c.h.b16 %v188
      %v303 = vunpack.c.l.b16 %v189
      %v304 = vunpack.c.h.b16 %v189
      %v305 = vunpack.c.l.b16 %v190
      %v306 = vunpack.c.h.b16 %v190
      %v307 = vunpack.c.l.b16 %v191
      %v308 = vunpack.c.h.b16 %v191
      %v309 = vunpack.c.l.b16 %v192
      %v310 = vunpack.c.h.b16 %v192
      %v311 = vunpack.c.l.b16 %v193
      %v312 = vunpack.c.h.b16 %v193
      %v313 = vunpack.c.l.b16 %v194
      %v314 = vunpack.c.h.b16 %v194
      %v315 = vunpack.c.l.b16 %v195
      %v316 = vunpack.c.h.b16 %v195
      %v317 = vunpack.c.l.b16 %v196
      %v318 = vunpack.c.h.b16 %v196
      %v319 = vunpack.c.l.b16 %v197
      %v320 = vunpack.c.h.b16 %v197
      %v321 = vunpack.c.l.b16 %v198
      %v322 = vunpack.c.h.b16 %v198
      %v323 = vunpack.c.l.b16 %v199
      %v324 = vunpack.c.h.b16 %v199
      %v325 = vunpack.c.l.b16 %v200
      %v326 = vunpack.c.h.b16 %v200
      %v327 = vunpack.c.l.b16 %v201
      %v328 = vunpack.c.h.b16 %v201
      %v329 = vunpack.c.l.b16 %v202
      %v330 = vunpack.c.h.b16 %v202
      %v331 = vunpack.c.l.b16 %v203
      %v332 = vunpack.c.h.b16 %v203
      %v333 = vunpack.c.l.b16 %v204
      %v334 = vunpack.c.h.b16 %v204
      %v335 = vunpack.c.l.b16 %v205
      %v336 = vunpack.c.h.b16 %v205
      %v337 = vunpack.c.l.b16 %v206
      %v338 = vunpack.c.h.b16 %v206
      %v339 = vunpack.c.l.b16 %v207
      %v340 = vunpack.c.h.b16 %v207
      %v341 = vunpack.c.l.b16 %v208
      %v342 = vunpack.c.h.b16 %v208
      %v343 = vunpack.c.l.b16 %v209
      %v344 = vunpack.c.h.b16 %v209
      %v345 = vpack.c.b16 %v283, %v281
      %v346 = vpack.c.b16 %v284, %v282
      %v347 = vpack.c.b16 %v287, %v285
      %v348 = vpack.c.b16 %v288, %v286
      %v349 = vpack.c.b16 %v291, %v289
      %v350 = vpack.c.b16 %v292, %v290
      %v351 = vpack.c.b16 %v295, %v293
      %v352 = vpack.c.b16 %v296, %v294
      %v353 = vpack.c.b16 %v299, %v297
      %v354 = vpack.c.b16 %v300, %v298
      %v355 = vpack.c.b16 %v303, %v301
      %v356 = vpack.c.b16 %v304, %v302
      %v357 = vpack.c.b16 %v307, %v305
      %v358 = vpack.c.b16 %v308, %v306
      %v359 = vpack.c.b16 %v311, %v309
      %v360 = vpack.c.b16 %v312, %v310
      %v361 = vpack.c.b16 %v315, %v313
      %v362 = vpack.c.b16 %v316, %v314
      %v363 = vpack.c.b16 %v319, %v317
      %v364 = vpack.c.b16 %v320, %v318
      %v365 = vpack.c.b16 %v323, %v321
      %v366 = vpack.c.b16 %v324, %v322
      %v367 = vpack.c.b16 %v327, %v325
      %v368 = vpack.c.b16 %v328, %v326
      %v369 = vpack.c.b16 %v331, %v329
      %v370 = vpack.c.b16 %v332, %v330
      %v371 = vpack.c.b16 %v335, %v333
      %v372 = vpack.c.b16 %v336, %v334
      %v373 = vpack.c.b16 %v339, %v337
      %v374 = vpack.c.b16 %v340, %v338
      %v375 = vpack.c.b16 %v343, %v341
      %v376 = vpack.c.b16 %v344, %v342
      %v441 = vunpack.c.l.b16 %v210
      %v442 = vunpack.c.l.b16 %v211
      %v443 = vunpack.c.l.b16 %v212
      %v444 = vunpack.c.l.b16 %v213
      %v445 = vunpack.c.l.b16 %v214
      %v446 = vunpack.c.l.b16 %v215
      %v447 = vunpack.c.l.b16 %v216
      %v448 = vunpack.c.l.b16 %v217
      %v449 = vunpack.c.l.b16 %v218
      %v450 = vunpack.c.l.b16 %v219
      %v451 = vunpack.c.l.b16 %v220
      %v452 = vunpack.c.l.b16 %v221
      %v453 = vunpack.c.l.b16 %v222
      %v454 = vunpack.c.l.b16 %v223
      %v455 = vunpack.c.l.b16 %v224
      %v456 = vunpack.c.l.b16 %v225
      %v457 = vunpack.c.l.b16 %v226
      %v458 = vunpack.c.l.b16 %v227
      %v459 = vunpack.c.l.b16 %v228
      %v460 = vunpack.c.l.b16 %v229
      %v461 = vunpack.c.l.b16 %v230
      %v462 = vunpack.c.l.b16 %v231
      %v463 = vunpack.c.l.b16 %v232
      %v464 = vunpack.c.l.b16 %v233
      %v465 = vunpack.c.l.b16 %v234
      %v466 = vunpack.c.l.b16 %v235
      %v467 = vunpack.c.l.b16 %v236
      %v468 = vunpack.c.l.b16 %v237
      %v469 = vunpack.c.l.b16 %v238
      %v470 = vunpack.c.l.b16 %v239
      %v471 = vunpack.c.l.b16 %v240
      %v472 = vunpack.c.l.b16 %v241
      %v473 = vpack.c.b16 %v442, %v441
      %v474 = vpack.c.b16 %v444, %v443
      %v475 = vpack.c.b16 %v446, %v445
      %v476 = vpack.c.b16 %v448, %v447
      %v477 = vpack.c.b16 %v450, %v449
      %v478 = vpack.c.b16 %v452, %v451
      %v479 = vpack.c.b16 %v454, %v453
      %v480 = vpack.c.b16 %v456, %v455
      %v481 = vpack.c.b16 %v458, %v457
      %v482 = vpack.c.b16 %v460, %v459
      %v483 = vpack.c.b16 %v462, %v461
      %v484 = vpack.c.b16 %v464, %v463
      %v485 = vpack.c.b16 %v466, %v465
      %v486 = vpack.c.b16 %v468, %v467
      %v487 = vpack.c.b16 %v470, %v469
      %v488 = vpack.c.b16 %v472, %v471
      %505 = vmatprep.subr.bf16.mxu0 0
      %506 = vmatpush1.bf16.msra.mxu0 %v480
      %507 = vmatprep.subr.bf16.mxu0 0
      %508 = vmatpush1.bf16.msra.mxu0 %v479
      %509 = vmatprep.subr.bf16.mxu0 0
      %510 = vmatpush1.bf16.msra.mxu0 %v478
      %511 = vmatprep.subr.bf16.mxu0 0
      %512 = vmatpush1.bf16.msra.mxu0 %v477
      %513 = vmatprep.subr.bf16.mxu0 0
      %514 = vmatpush1.bf16.msra.mxu0 %v476
      %515 = vmatprep.subr.bf16.mxu0 0
      %516 = vmatpush1.bf16.msra.mxu0 %v475
      %517 = vmatprep.subr.bf16.mxu0 0
      %518 = vmatpush1.bf16.msra.mxu0 %v474
      %519 = vmatprep.subr.bf16.mxu0 0
      %520 = vmatpush1.bf16.msra.mxu0 %v473
      %521 = vmatprep.subr.bf16.mxu0 0
      %522 = vmatpush2.bf16.msra.mxu0 %v488
      %523 = vmatprep.subr.bf16.mxu0 0
      %524 = vmatpush2.bf16.msra.mxu0 %v487
      %525 = vmatprep.subr.bf16.mxu0 0
      %526 = vmatpush2.bf16.msra.mxu0 %v486
      %527 = vmatprep.subr.bf16.mxu0 0
      %528 = vmatpush2.bf16.msra.mxu0 %v485
      %529 = vmatprep.subr.bf16.mxu0 0
      %530 = vmatpush2.bf16.msra.mxu0 %v484
      %531 = vmatprep.subr.bf16.mxu0 0
      %532 = vmatpush2.bf16.msra.mxu0 %v483
      %533 = vmatprep.subr.bf16.mxu0 0
      %534 = vmatpush2.bf16.msra.mxu0 %v482
      %535 = vmatprep.subr.bf16.mxu0 0
      %536 = vmatpush2.bf16.msra.mxu0 %v481
      %537 = vmatprep.mubr.bf16.mxu0 %v346
      %538 = vmatmul.mubr.bf16.gmra.mxu0 %v345
      %v539 = vpop.f32.mrf.mxu0
      %v540 = vadd.f32 %v247, %v539
      %v541 = vpop.f32.mrf.mxu0
      %v542 = vpop.f32.mrf.mxu0
      %v543 = vadd.f32 %v247, %v542
      %v544 = vpop.f32.mrf.mxu0
      %545 = vmatprep.mubr.bf16.mxu0 %v348
      %546 = vmatmul.mubr.bf16.gmra.mxu0 %v347
      %v547 = vpop.f32.mrf.mxu0
      %v548 = vadd.f32 %v247, %v547
      %v549 = vpop.f32.mrf.mxu0
      %v550 = vpop.f32.mrf.mxu0
      %v551 = vadd.f32 %v247, %v550
      %v552 = vpop.f32.mrf.mxu0
      %553 = vmatprep.mubr.bf16.mxu0 %v350
      %554 = vmatmul.mubr.bf16.gmra.mxu0 %v349
      %v555 = vpop.f32.mrf.mxu0
      %v556 = vadd.f32 %v247, %v555
      %v557 = vpop.f32.mrf.mxu0
      %v558 = vpop.f32.mrf.mxu0
      %v559 = vadd.f32 %v247, %v558
      %v560 = vpop.f32.mrf.mxu0
      %561 = vmatprep.mubr.bf16.mxu0 %v352
      %562 = vmatmul.mubr.bf16.gmra.mxu0 %v351
      %v563 = vpop.f32.mrf.mxu0
      %v564 = vadd.f32 %v247, %v563
      %v565 = vpop.f32.mrf.mxu0
      %v566 = vpop.f32.mrf.mxu0
      %v567 = vadd.f32 %v247, %v566
      %v568 = vpop.f32.mrf.mxu0
      %569 = vmatprep.mubr.bf16.mxu0 %v354
      %570 = vmatmul.mubr.bf16.gmra.mxu0 %v353
      %v571 = vpop.f32.mrf.mxu0
      %v572 = vadd.f32 %v247, %v571
      %v573 = vpop.f32.mrf.mxu0
      %v574 = vpop.f32.mrf.mxu0
      %v575 = vadd.f32 %v247, %v574
      %v576 = vpop.f32.mrf.mxu0
      %577 = vmatprep.mubr.bf16.mxu0 %v356
      %578 = vmatmul.mubr.bf16.gmra.mxu0 %v355
      %v579 = vpop.f32.mrf.mxu0
      %v580 = vadd.f32 %v247, %v579
      %v581 = vpop.f32.mrf.mxu0
      %v582 = vpop.f32.mrf.mxu0
      %v583 = vadd.f32 %v247, %v582
      %v584 = vpop.f32.mrf.mxu0
      %585 = vmatprep.mubr.bf16.mxu0 %v358
      %586 = vmatmul.mubr.bf16.gmra.mxu0 %v357
      %v587 = vpop.f32.mrf.mxu0
      %v588 = vadd.f32 %v247, %v587
      %v589 = vpop.f32.mrf.mxu0
      %v590 = vpop.f32.mrf.mxu0
      %v591 = vadd.f32 %v247, %v590
      %v592 = vpop.f32.mrf.mxu0
      %593 = vmatprep.mubr.bf16.mxu0 %v360
      %594 = vmatmul.mubr.bf16.gmra.mxu0 %v359
      %v595 = vpop.f32.mrf.mxu0
      %v596 = vadd.f32 %v247, %v595
      %v597 = vpop.f32.mrf.mxu0
      %v598 = vpop.f32.mrf.mxu0
      %v599 = vadd.f32 %v247, %v598
      %v600 = vpop.f32.mrf.mxu0
      %601 = vmatprep.mubr.bf16.mxu0 %v362
      %602 = vmatmul.mubr.bf16.gmra.mxu0 %v361
      %v603 = vpop.f32.mrf.mxu0
      %v604 = vadd.f32 %v247, %v603
      %v605 = vpop.f32.mrf.mxu0
      %v606 = vpop.f32.mrf.mxu0
      %v607 = vadd.f32 %v247, %v606
      %v608 = vpop.f32.mrf.mxu0
      %609 = vmatprep.mubr.bf16.mxu0 %v364
      %610 = vmatmul.mubr.bf16.gmra.mxu0 %v363
      %v611 = vpop.f32.mrf.mxu0
      %v612 = vadd.f32 %v247, %v611
      %v613 = vpop.f32.mrf.mxu0
      %v614 = vpop.f32.mrf.mxu0
      %v615 = vadd.f32 %v247, %v614
      %v616 = vpop.f32.mrf.mxu0
      %617 = vmatprep.mubr.bf16.mxu0 %v366
      %618 = vmatmul.mubr.bf16.gmra.mxu0 %v365
      %v619 = vpop.f32.mrf.mxu0
      %v620 = vadd.f32 %v247, %v619
      %v621 = vpop.f32.mrf.mxu0
      %v622 = vpop.f32.mrf.mxu0
      %v623 = vadd.f32 %v247, %v622
      %v624 = vpop.f32.mrf.mxu0
      %625 = vmatprep.mubr.bf16.mxu0 %v368
      %626 = vmatmul.mubr.bf16.gmra.mxu0 %v367
      %v627 = vpop.f32.mrf.mxu0
      %v628 = vadd.f32 %v247, %v627
      %v629 = vpop.f32.mrf.mxu0
      %v630 = vpop.f32.mrf.mxu0
      %v631 = vadd.f32 %v247, %v630
      %v632 = vpop.f32.mrf.mxu0
      %633 = vmatprep.mubr.bf16.mxu0 %v370
      %634 = vmatmul.mubr.bf16.gmra.mxu0 %v369
      %v635 = vpop.f32.mrf.mxu0
      %v636 = vadd.f32 %v247, %v635
      %v637 = vpop.f32.mrf.mxu0
      %v638 = vpop.f32.mrf.mxu0
      %v639 = vadd.f32 %v247, %v638
      %v640 = vpop.f32.mrf.mxu0
      %641 = vmatprep.mubr.bf16.mxu0 %v372
      %642 = vmatmul.mubr.bf16.gmra.mxu0 %v371
      %v643 = vpop.f32.mrf.mxu0
      %v644 = vadd.f32 %v247, %v643
      %v645 = vpop.f32.mrf.mxu0
      %v646 = vpop.f32.mrf.mxu0
      %v647 = vadd.f32 %v247, %v646
      %v648 = vpop.f32.mrf.mxu0
      %649 = vmatprep.mubr.bf16.mxu0 %v374
      %650 = vmatmul.mubr.bf16.gmra.mxu0 %v373
      %v651 = vpop.f32.mrf.mxu0
      %v652 = vadd.f32 %v247, %v651
      %v653 = vpop.f32.mrf.mxu0
      %v654 = vpop.f32.mrf.mxu0
      %v655 = vadd.f32 %v247, %v654
      %v656 = vpop.f32.mrf.mxu0
      %657 = vmatprep.mubr.bf16.mxu0 %v376
      %658 = vmatmul.mubr.bf16.gmra.mxu0 %v375
      %v659 = vpop.f32.mrf.mxu0
      %v660 = vadd.f32 %v247, %v659
      %v661 = vpop.f32.mrf.mxu0
      %v662 = vpop.f32.mrf.mxu0
      %v663 = vadd.f32 %v247, %v662
      %v664 = vpop.f32.mrf.mxu0
      %665 = vdwg.mxu0
      %v666 = vmax.f32 %v540, 0.0
      %v667 = vmax.f32 %v543, 0.0
      %v668 = vmax.f32 %v548, 0.0
      %v669 = vmax.f32 %v551, 0.0
      %v670 = vmax.f32 %v556, 0.0
      %v671 = vmax.f32 %v559, 0.0
      %v672 = vmax.f32 %v564, 0.0
      %v673 = vmax.f32 %v567, 0.0
      %v674 = vmax.f32 %v572, 0.0
      %v675 = vmax.f32 %v575, 0.0
      %v676 = vmax.f32 %v580, 0.0
      %v677 = vmax.f32 %v583, 0.0
      %v678 = vmax.f32 %v588, 0.0
      %v679 = vmax.f32 %v591, 0.0
      %v680 = vmax.f32 %v596, 0.0
      %v681 = vmax.f32 %v599, 0.0
      %v682 = vmax.f32 %v604, 0.0
      %v683 = vmax.f32 %v607, 0.0
      %v684 = vmax.f32 %v612, 0.0
      %v685 = vmax.f32 %v615, 0.0
      %v686 = vmax.f32 %v620, 0.0
      %v687 = vmax.f32 %v623, 0.0
      %v688 = vmax.f32 %v628, 0.0
      %v689 = vmax.f32 %v631, 0.0
      %v690 = vmax.f32 %v636, 0.0
      %v691 = vmax.f32 %v639, 0.0
      %v692 = vmax.f32 %v644, 0.0
      %v693 = vmax.f32 %v647, 0.0
      %v694 = vmax.f32 %v652, 0.0
      %v695 = vmax.f32 %v655, 0.0
      %v696 = vmax.f32 %v660, 0.0
      %v697 = vmax.f32 %v663, 0.0
      %v698 = vpack.c.bf16 %v667, %v666
      %v699 = vpack.c.bf16 %v669, %v668
      %v700 = vpack.c.bf16 %v671, %v670
      %v701 = vpack.c.bf16 %v673, %v672
      %v702 = vpack.c.bf16 %v675, %v674
      %v703 = vpack.c.bf16 %v677, %v676
      %v704 = vpack.c.bf16 %v679, %v678
      %v705 = vpack.c.bf16 %v681, %v680
      %v706 = vpack.c.bf16 %v683, %v682
      %v707 = vpack.c.bf16 %v685, %v684
      %v708 = vpack.c.bf16 %v687, %v686
      %v709 = vpack.c.bf16 %v689, %v688
      %v710 = vpack.c.bf16 %v691, %v690
      %v711 = vpack.c.bf16 %v693, %v692
      %v712 = vpack.c.bf16 %v695, %v694
      %v713 = vpack.c.bf16 %v697, %v696
      %v730 = vunpack.c.l.b16 %v698
      %v731 = vunpack.c.h.b16 %v698
      %v732 = vunpack.c.l.b16 %v699
      %v733 = vunpack.c.h.b16 %v699
      %v734 = vunpack.c.l.b16 %v700
      %v735 = vunpack.c.h.b16 %v700
      %v736 = vunpack.c.l.b16 %v701
      %v737 = vunpack.c.h.b16 %v701
      %v738 = vunpack.c.l.b16 %v702
      %v739 = vunpack.c.h.b16 %v702
      %v740 = vunpack.c.l.b16 %v703
      %v741 = vunpack.c.h.b16 %v703
      %v742 = vunpack.c.l.b16 %v704
      %v743 = vunpack.c.h.b16 %v704
      %v744 = vunpack.c.l.b16 %v705
      %v745 = vunpack.c.h.b16 %v705
      %v746 = vunpack.c.l.b16 %v706
      %v747 = vunpack.c.h.b16 %v706
      %v748 = vunpack.c.l.b16 %v707
      %v749 = vunpack.c.h.b16 %v707
      %v750 = vunpack.c.l.b16 %v708
      %v751 = vunpack.c.h.b16 %v708
      %v752 = vunpack.c.l.b16 %v709
      %v753 = vunpack.c.h.b16 %v709
      %v754 = vunpack.c.l.b16 %v710
      %v755 = vunpack.c.h.b16 %v710
      %v756 = vunpack.c.l.b16 %v711
      %v757 = vunpack.c.h.b16 %v711
      %v758 = vunpack.c.l.b16 %v712
      %v759 = vunpack.c.h.b16 %v712
      %v760 = vunpack.c.l.b16 %v713
      %v761 = vunpack.c.h.b16 %v713
      %v762 = vpack.c.b16 %v730, %v730
      %v763 = vpack.c.b16 %v731, %v731
      %v764 = vpack.c.b16 %v732, %v732
      %v765 = vpack.c.b16 %v733, %v733
      %v766 = vpack.c.b16 %v734, %v734
      %v767 = vpack.c.b16 %v735, %v735
      %v768 = vpack.c.b16 %v736, %v736
      %v769 = vpack.c.b16 %v737, %v737
      %v770 = vpack.c.b16 %v738, %v738
      %v771 = vpack.c.b16 %v739, %v739
      %v772 = vpack.c.b16 %v740, %v740
      %v773 = vpack.c.b16 %v741, %v741
      %v774 = vpack.c.b16 %v742, %v742
      %v775 = vpack.c.b16 %v743, %v743
      %v776 = vpack.c.b16 %v744, %v744
      %v777 = vpack.c.b16 %v745, %v745
      %v778 = vpack.c.b16 %v746, %v746
      %v779 = vpack.c.b16 %v747, %v747
      %v780 = vpack.c.b16 %v748, %v748
      %v781 = vpack.c.b16 %v749, %v749
      %v782 = vpack.c.b16 %v750, %v750
      %v783 = vpack.c.b16 %v751, %v751
      %v784 = vpack.c.b16 %v752, %v752
      %v785 = vpack.c.b16 %v753, %v753
      %v786 = vpack.c.b16 %v754, %v754
      %v787 = vpack.c.b16 %v755, %v755
      %v788 = vpack.c.b16 %v756, %v756
      %v789 = vpack.c.b16 %v757, %v757
      %v790 = vpack.c.b16 %v758, %v758
      %v791 = vpack.c.b16 %v759, %v759
      %v792 = vpack.c.b16 %v760, %v760
      %v793 = vpack.c.b16 %v761, %v761
      %826 = vst [vmem:[%s175] sm:$0xf] %v762
      %827 = vst [vmem:[%s175 + $0x4] sm:$0xf] %v763
      %828 = vst [vmem:[%s175 + $0x8] sm:$0xf] %v764
      %829 = vst [vmem:[%s175 + $0xc] sm:$0xf] %v765
      %830 = vst [vmem:[%s175 + $0x10] sm:$0xf] %v766
      %831 = vst [vmem:[%s175 + $0x14] sm:$0xf] %v767
      %832 = vst [vmem:[%s175 + $0x18] sm:$0xf] %v768
      %833 = vst [vmem:[%s175 + $0x1c] sm:$0xf] %v769
      %834 = vst [vmem:[%s175 + $0x20] sm:$0xf] %v770
      %835 = vst [vmem:[%s175 + $0x24] sm:$0xf] %v771
      %836 = vst [vmem:[%s175 + $0x28] sm:$0xf] %v772
      %837 = vst [vmem:[%s175 + $0x2c] sm:$0xf] %v773
      %838 = vst [vmem:[%s175 + $0x30] sm:$0xf] %v774
      %839 = vst [vmem:[%s175 + $0x34] sm:$0xf] %v775
      %840 = vst [vmem:[%s175 + $0x38] sm:$0xf] %v776
      %841 = vst [vmem:[%s175 + $0x3c] sm:$0xf] %v777
      %842 = vst [vmem:[%s175 + $0x40] sm:$0xf] %v778
      %843 = vst [vmem:[%s175 + $0x44] sm:$0xf] %v779
      %844 = vst [vmem:[%s175 + $0x48] sm:$0xf] %v780
      %845 = vst [vmem:[%s175 + $0x4c] sm:$0xf] %v781
      %846 = vst [vmem:[%s175 + $0x50] sm:$0xf] %v782
      %847 = vst [vmem:[%s175 + $0x54] sm:$0xf] %v783
      %848 = vst [vmem:[%s175 + $0x58] sm:$0xf] %v784
      %849 = vst [vmem:[%s175 + $0x5c] sm:$0xf] %v785
      %850 = vst [vmem:[%s175 + $0x60] sm:$0xf] %v786
      %851 = vst [vmem:[%s175 + $0x64] sm:$0xf] %v787
      %852 = vst [vmem:[%s175 + $0x68] sm:$0xf] %v788
      %853 = vst [vmem:[%s175 + $0x6c] sm:$0xf] %v789
      %854 = vst [vmem:[%s175 + $0x70] sm:$0xf] %v790
      %855 = vst [vmem:[%s175 + $0x74] sm:$0xf] %v791
      %856 = vst [vmem:[%s175 + $0x78] sm:$0xf] %v792
      %857 = vst [vmem:[%s175 + $0x7c] sm:$0xf] %v793
      %s858 = smul.u32 32, %s14
      %p859 = scmp.lt.s32.totalorder %s858, 63
      %s860 = scalar_select %p859, %s858, 63
      %s861 = smul.addr %s860, 4
      %s862 = scalar_lea.vmem %s3, %s861
      // Predicated region
      $region33: #{forward.8} parent=31 // pred_check
        %p863 = pneg %p100
      $region34: #{forward.8} parent=31 // pred_check_branch
        %865 = sbr.rel (%p863) target = $region36
      $region35: #{forward.8} parent=31 // pred_region
        %s866 = smul.u32 32, %s14
      $region36: #{forward.8} parent=31 // pred_fallthru
        _
    $region32: #{forward.8} parent=5 // pred_fallthru
      _
    %p867 = scmp.le.s32.totalorder 2, %s9
    // Predicated region
    $region37: #{forward.8} parent=5 // pred_check
      %p868 = pneg %p867
    $region38: #{forward.8} parent=5 // pred_check_branch
      %870 = sbr.rel (%p868) target = $region40
    $region39: #{forward.8} parent=5 // pred_region
      %s871 = ssub.s32 %s9, 2
      // Predicated region
      $region41: #{forward.8} parent=39 // pred_check
        %p872 = pneg %p106
      $region42: #{forward.8} parent=39 // pred_check_branch
        %874 = sbr.rel (%p872) target = $region44
      $region43: #{forward.8} parent=39 // pred_region
        %s875 = smul.u32 32, %s15
        %p876 = scmp.lt.s32.totalorder %s875, 63
        %s877 = scalar_select %p876, %s875, 63
        %s878 = smul.addr %s877, 4
        %s879 = scalar_lea.vmem %s3, %s878
      $region44: #{forward.8} parent=39 // pred_fallthru
        _
    $region40: #{forward.8} parent=5 // pred_fallthru
      _
  $region6: #{forward.8} parent=0 // loop_footer
    %s13 = sadd.s32 1, %s9
  $region7: #{forward.8} parent=0 // loop_footer_branch
    %8 = sbr.rel target = $region3
  $region8: #{forward.8} parent=0 // loop_exit
    _

</llo_original>
